<compile_context>
chip_gen: v7x
topology: tpu7x:2x2x1
jax: 0.10.0
libtpu: 0.0.40
codegen_flags: <defaults>
</compile_context>

<pallas_src>
import functools

import jax
import jax.numpy as jnp
from jax import lax
from jax.experimental import pallas as pl
from jax.experimental.pallas import tpu as pltpu

BN_EPS = 1e-5


def _round_up(x, m):
    return (x + m - 1) // m * m


def _pick_row_tile(m, cap=2048):
    """Largest divisor of m that is a multiple of 8 and <= cap."""
    best = 0
    for tm in range(8, min(m, cap) + 1, 8):
        if m % tm == 0:
            best = tm
    if best:
        return best
    # Guarded fallback: a full-array block is only used when no 8-aligned
    # divisor exists; it is safe at these demo sizes.
    # TODO(synk): pad M up to a multiple of 8 for awkward shapes instead.
    return m


def conv_stats_kernel(x_ref, w_ref, conv_ref, sum_ref, ssq_ref, acc_ref,
                      *, H, W, C, ksize):
    # x_ref   : (1, H+2p, W+2p, C)       bf16 padded NHWC image for batch n
    # w_ref   : (ksize, ksize*C, Coutp)  bf16 weights (same block each step -> resident)
    # conv_ref: (1, H*W, Coutp)          bf16 conv intermediate for batch n
    # sum_ref / ssq_ref: (1, 1, Coutp)   f32 per-batch partial BN statistics
    # acc_ref : (H*W, Coutp)             f32 VMEM scratch accumulator

    # Fold the kx taps into the MXU contraction dim: one width-unfolded bf16
    # slab built directly from the ref (no f32 staging copy, no casts).
    wide = jnp.concatenate(
        [x_ref[0, :, kx:kx + W, :] for kx in range(ksize)], axis=-1
    )  # (H+2p, W, ksize*C)

    for ky in range(ksize):                       # ksize matmuls, K = ksize*C
        slab = wide[ky:ky + H].reshape(H * W, ksize * C)
        part = jnp.dot(slab, w_ref[ky], preferred_element_type=jnp.float32)
        if ky == 0:                               # per-tap stores bound liveness
            acc_ref[...] = part
        else:
            acc_ref[...] += part

    acc = acc_ref[...]
    conv_ref[0] = acc.astype(conv_ref.dtype)      # bf16 intermediate to HBM

    # Per-batch partial stats in f32 (reduced over N in the finalize step).
    # TODO(synk): E[x^2]-E[x]^2 can cancel badly when |mean| >> std; switch to
    # a shifted / Welford-style finalize if real activation scales need it.
    sum_ref[0] = jnp.sum(acc, axis=0, keepdims=True)
    ssq_ref[0] = jnp.sum(acc * acc, axis=0, keepdims=True)


def norm_relu_kernel(conv_ref, scale_ref, shift_ref, o_ref):
    # Fused normalize + ReLU; lane-dense Coutp, single store per tile.
    x = conv_ref[...].astype(jnp.float32)
    o_ref[...] = jnp.maximum(x * scale_ref[...] + shift_ref[...], 0.0)


@functools.partial(jax.jit, static_argnames=("ksize",))
def conv_bn_relu(x_nchw, weight, bias, gamma, beta, *, ksize):
    del bias  # exactly cancelled by training-mode BN's batch-mean subtraction
    N, C, H, W = x_nchw.shape
    Cout = weight.shape[0]
    pad = ksize // 2
    # Lane-dense output channels; round to 256 when Cout > 128 so the
    # 256-wide v6e/v7x MXU output side is filled (v5e could stay at 128).
    Coutp = _round_up(Cout, 256 if Cout > 128 else 128)
    M = N * H * W
    Kdim = C * ksize * ksize

    # --- layout prep only: one padded NHWC bf16 copy (no k^2 im2col in HBM) ---
    x_nhwc = jnp.transpose(x_nchw, (0, 2, 3, 1))
    xpad = jnp.pad(x_nhwc, ((0, 0), (pad, pad), (pad, pad), (0, 0)))
    xpad = xpad.astype(jnp.bfloat16)
    # weight (Cout, C, kh, kw) -> (kh, kw*C, Coutp): per-ky planes whose rows
    # are ordered (kx, C) to match the in-kernel slab layout.
    w = jnp.transpose(weight, (2, 3, 1, 0)).reshape(ksize, ksize * C, Cout)
    w = jnp.pad(w, ((0, 0), (0, 0), (0, Coutp - Cout))).astype(jnp.bfloat16)

    Hp, Wp = H + 2 * pad, W + 2 * pad

    # ---------------- pass 1: conv + per-batch sum / sumsq ------------------
    kernel1 = functools.partial(conv_stats_kernel, H=H, W=W, C=C, ksize=ksize)
    conv_flat, sums, ssqs = pl.pallas_call(
        kernel1,
        grid=(N,),
        in_specs=[
            pl.BlockSpec((1, Hp, Wp, C), lambda n: (n, 0, 0, 0)),
            pl.BlockSpec((ksize, ksize * C, Coutp), lambda n: (0, 0, 0)),
        ],
        out_specs=[
            pl.BlockSpec((1, H * W, Coutp), lambda n: (n, 0, 0)),
            pl.BlockSpec((1, 1, Coutp), lambda n: (n, 0, 0)),
            pl.BlockSpec((1, 1, Coutp), lambda n: (n, 0, 0)),
        ],
        out_shape=[
            jax.ShapeDtypeStruct((N, H * W, Coutp), jnp.bfloat16),
            jax.ShapeDtypeStruct((N, 1, Coutp), jnp.float32),
            jax.ShapeDtypeStruct((N, 1, Coutp), jnp.float32),
        ],
        scratch_shapes=[pltpu.VMEM((H * W, Coutp), jnp.float32)],
        compiler_params=pltpu.CompilerParams(
            dimension_semantics=("parallel",),      # per-batch partials -> both TCs on v7x
            vmem_limit_bytes=32 * 1024 * 1024),
        cost_estimate=pl.CostEstimate(
            flops=2 * M * Kdim * Coutp,
            transcendentals=0,
            bytes_accessed=int(xpad.size * 2 + w.size * 2
                               + M * Coutp * 2 + 2 * N * Coutp * 4),
        ),
    )(xpad, w)

    # -------- finalize BN stats once (O(C_out) work, rsqrt once/channel) -----
    total_sum = jnp.sum(sums, axis=(0, 1))
    total_ssq = jnp.sum(ssqs, axis=(0, 1))
    mean = total_sum / M
    var = jnp.maximum(total_ssq / M - mean * mean, 0.0)   # biased (training) var
    gamma_p = jnp.pad(gamma.astype(jnp.float32), (0, Coutp - Cout))
    beta_p = jnp.pad(beta.astype(jnp.float32), (0, Coutp - Cout))
    scale = gamma_p * lax.rsqrt(var + BN_EPS)
    shift = beta_p - mean * scale

    # ---------------- pass 2: normalize + ReLU (parallel over M) ------------
    conv2d = conv_flat.reshape(M, Coutp)          # merges leading dims only
    TM = _pick_row_tile(M)
    # TODO(synk): emit bf16 here and return NHWC if the downstream consumer
    # tolerates it (halves the epilogue writeback and drops the transpose);
    # kept f32 + NCHW to match the PyTorch f32 forward.
    out_flat = pl.pallas_call(
        norm_relu_kernel,
        grid=(pl.cdiv(M, TM),),
        in_specs=[
            pl.BlockSpec((TM, Coutp), lambda i: (i, 0)),
            pl.BlockSpec((1, Coutp), lambda i: (0, 0)),
            pl.BlockSpec((1, Coutp), lambda i: (0, 0)),
        ],
        out_specs=pl.BlockSpec((TM, Coutp), lambda i: (i, 0)),
        out_shape=jax.ShapeDtypeStruct((M, Coutp), jnp.float32),
        compiler_params=pltpu.CompilerParams(
            dimension_semantics=("parallel",)),
    )(conv2d, scale.reshape(1, Coutp), shift.reshape(1, Coutp))

    out = out_flat.reshape(N, H, W, Coutp)[..., :Cout]
    return jnp.transpose(out, (0, 3, 1, 2))       # back to NCHW


def reference(x, weight, bias, gamma, beta, ksize):
    # f32 reference of the PyTorch forward, with the same bf16 quantization of
    # the matmul INPUTS as the kernel (the MXU consumes bf16).  The kernel's
    # bf16 conv intermediate is NOT mirrored here; it bounds the end-to-end
    # error by ~0.5 bf16 ULP of the conv value times the BN scale (< 1e-2 at
    # these magnitudes), covered by the comparison tolerance in __main__.
    pad = ksize // 2
    xq = x.astype(jnp.bfloat16).astype(jnp.float32)
    wq = weight.astype(jnp.bfloat16).astype(jnp.float32)
    conv = lax.conv_general_dilated(
        xq, wq, window_strides=(1, 1),
        padding=((pad, pad), (pad, pad)),
        dimension_numbers=("NCHW", "OIHW", "NCHW"),
        precision=lax.Precision.HIGHEST,
    ) + bias[None, :, None, None]
    mean = jnp.mean(conv, axis=(0, 2, 3), keepdims=True)
    var = jnp.mean((conv - mean) ** 2, axis=(0, 2, 3), keepdims=True)
    y = (conv - mean) * lax.rsqrt(var + BN_EPS) * gamma[None, :, None, None] \
        + beta[None, :, None, None]
    return jnp.maximum(y, 0.0)


if __name__ == "__main__":
    # Small deterministic setup: batch=2, in_channels=4, out_channels=8,
    # spatial=16x16, ksize=3.
    N, C_in, C_out, H, W, ksize = 2, 4, 8, 16, 16, 3

    key = jax.random.PRNGKey(0)
    kx, kw, kb = jax.random.split(key, 3)
    x = jax.random.normal(kx, (N, C_in, H, W), dtype=jnp.float32)
    weight = 0.1 * jax.random.normal(kw, (C_out, C_in, ksize, ksize), dtype=jnp.float32)
    bias = 0.1 * jax.random.normal(kb, (C_out,), dtype=jnp.float32)
    gamma = jnp.ones((C_out,), dtype=jnp.float32)   # BatchNorm2d default init
    beta = jnp.zeros((C_out,), dtype=jnp.float32)

    out = jax.block_until_ready(conv_bn_relu(x, weight, bias, gamma, beta, ksize=ksize))
    ref = jax.block_until_ready(reference(x, weight, bias, gamma, beta, ksize))

    assert out.shape == (N, C_out, H, W)
    err = float(jnp.max(jnp.abs(out - ref)))
    # Tolerance sized for the bf16 conv intermediate (<= ~0.5 bf16 ULP of the
    # conv value, scaled by the BN inv-std); measured error is well inside it.
    assert jnp.allclose(out, ref, atol=2e-2, rtol=2e-2), err

    print("KERNEL_OK")
</pallas_src>

<mosaic_0001>
module attributes {stable_mosaic.version = 11 : i64} {
  func.func @conv_stats_kernel(%arg0: i32, %arg1: memref<1x18x18x4xbf16, #tpu.memory_space<vmem>>, %arg2: memref<3x12x128xbf16, #tpu.memory_space<vmem>>, %arg3: memref<1x256x128xbf16, #tpu.memory_space<vmem>>, %arg4: memref<1x1x128xf32, #tpu.memory_space<vmem>>, %arg5: memref<1x1x128xf32, #tpu.memory_space<vmem>>, %arg6: memref<256x128xf32, #tpu.memory_space<vmem>>) attributes {dimension_semantics = [#tpu.dimension_semantics<parallel>], iteration_bounds = array<i64: 2>, scalar_prefetch = 0 : i64, scratch_operands = 1 : i64, tpu.core_type = #tpu.core_type<tc>, window_params = [{transform_indices = @transform_0, window_bounds = array<i64: 1, 18, 18, 4>}, {pipeline_mode = #tpu.pipeline_mode<synchronous>, transform_indices = @transform_1, window_bounds = array<i64: 3, 12, 128>}, {transform_indices = @transform_2, window_bounds = array<i64: 1, 256, 128>}, {transform_indices = @transform_3, window_bounds = array<i64: 1, 1, 128>}, {transform_indices = @transform_4, window_bounds = array<i64: 1, 1, 128>}]} {
    %c0 = arith.constant 0 : index
    %c0_0 = arith.constant 0 : index
    %c0_1 = arith.constant 0 : index
    %c0_2 = arith.constant 0 : index
    %0 = vector.load %arg1[%c0, %c0_0, %c0_1, %c0_2] : memref<1x18x18x4xbf16, #tpu.memory_space<vmem>>, vector<1x18x16x4xbf16>
    %1 = vector.shape_cast %0 : vector<1x18x16x4xbf16> to vector<18x16x4xbf16>
    %c0_3 = arith.constant 0 : index
    %c0_4 = arith.constant 0 : index
    %c1 = arith.constant 1 : index
    %c0_5 = arith.constant 0 : index
    %2 = vector.load %arg1[%c0_3, %c0_4, %c1, %c0_5] : memref<1x18x18x4xbf16, #tpu.memory_space<vmem>>, vector<1x18x16x4xbf16>
    %3 = vector.shape_cast %2 : vector<1x18x16x4xbf16> to vector<18x16x4xbf16>
    %c0_6 = arith.constant 0 : index
    %c0_7 = arith.constant 0 : index
    %c2 = arith.constant 2 : index
    %c0_8 = arith.constant 0 : index
    %4 = vector.load %arg1[%c0_6, %c0_7, %c2, %c0_8] : memref<1x18x18x4xbf16, #tpu.memory_space<vmem>>, vector<1x18x16x4xbf16>
    %5 = vector.shape_cast %4 : vector<1x18x16x4xbf16> to vector<18x16x4xbf16>
    %6 = tpu.concatenate %1, %3, %5 in 2 : vector<18x16x4xbf16>, vector<18x16x4xbf16>, vector<18x16x4xbf16> -> vector<18x16x12xbf16>
    %7 = vector.extract_strided_slice %6 {offsets = [0, 0, 0], sizes = [16, 16, 12], strides = [1, 1, 1]} : vector<18x16x12xbf16> to vector<16x16x12xbf16>
    %8 = vector.shape_cast %7 : vector<16x16x12xbf16> to vector<256x12xbf16>
    %c0_9 = arith.constant 0 : index
    %c0_10 = arith.constant 0 : index
    %c0_11 = arith.constant 0 : index
    %9 = vector.load %arg2[%c0_9, %c0_10, %c0_11] : memref<3x12x128xbf16, #tpu.memory_space<vmem>>, vector<1x12x128xbf16>
    %10 = vector.shape_cast %9 : vector<1x12x128xbf16> to vector<12x128xbf16>
    %cst = arith.constant dense<0.000000e+00> : vector<256x128xf32>
    %11 = tpu.matmul %8, %10, %cst {dimension_numbers = #tpu.dot_dimension_numbers<[1], [0], [0], [1], [0, 0, 1, 1], [], []>} : vector<256x12xbf16>, vector<12x128xbf16>, vector<256x128xf32> -> vector<256x128xf32>
    %c0_12 = arith.constant 0 : index
    %c0_13 = arith.constant 0 : index
    %12 = vector.load %arg6[%c0_12, %c0_13] : memref<256x128xf32, #tpu.memory_space<vmem>>, vector<256x128xf32>
    tpu.vector_store %arg6[%c0_12, %c0_13], %11 {strides = array<i32>} : memref<256x128xf32, #tpu.memory_space<vmem>>, vector<256x128xf32>,
    %13 = vector.extract_strided_slice %6 {offsets = [1, 0, 0], sizes = [16, 16, 12], strides = [1, 1, 1]} : vector<18x16x12xbf16> to vector<16x16x12xbf16>
    %14 = vector.shape_cast %13 : vector<16x16x12xbf16> to vector<256x12xbf16>
    %c1_14 = arith.constant 1 : index
    %c0_15 = arith.constant 0 : index
    %c0_16 = arith.constant 0 : index
    %15 = vector.load %arg2[%c1_14, %c0_15, %c0_16] : memref<3x12x128xbf16, #tpu.memory_space<vmem>>, vector<1x12x128xbf16>
    %16 = vector.shape_cast %15 : vector<1x12x128xbf16> to vector<12x128xbf16>
    %cst_17 = arith.constant dense<0.000000e+00> : vector<256x128xf32>
    %17 = tpu.matmul %14, %16, %cst_17 {dimension_numbers = #tpu.dot_dimension_numbers<[1], [0], [0], [1], [0, 0, 1, 1], [], []>} : vector<256x12xbf16>, vector<12x128xbf16>, vector<256x128xf32> -> vector<256x128xf32>
    %c0_18 = arith.constant 0 : index
    %c0_19 = arith.constant 0 : index
    %18 = vector.load %arg6[%c0_18, %c0_19] : memref<256x128xf32, #tpu.memory_space<vmem>>, vector<256x128xf32>
    %19 = arith.addf %18, %17 : vector<256x128xf32>
    %c0_20 = arith.constant 0 : index
    %c0_21 = arith.constant 0 : index
    %20 = vector.load %arg6[%c0_20, %c0_21] : memref<256x128xf32, #tpu.memory_space<vmem>>, vector<256x128xf32>
    tpu.vector_store %arg6[%c0_20, %c0_21], %19 {strides = array<i32>} : memref<256x128xf32, #tpu.memory_space<vmem>>, vector<256x128xf32>,
    %21 = vector.extract_strided_slice %6 {offsets = [2, 0, 0], sizes = [16, 16, 12], strides = [1, 1, 1]} : vector<18x16x12xbf16> to vector<16x16x12xbf16>
    %22 = vector.shape_cast %21 : vector<16x16x12xbf16> to vector<256x12xbf16>
    %c2_22 = arith.constant 2 : index
    %c0_23 = arith.constant 0 : index
    %c0_24 = arith.constant 0 : index
    %23 = vector.load %arg2[%c2_22, %c0_23, %c0_24] : memref<3x12x128xbf16, #tpu.memory_space<vmem>>, vector<1x12x128xbf16>
    %24 = vector.shape_cast %23 : vector<1x12x128xbf16> to vector<12x128xbf16>
    %cst_25 = arith.constant dense<0.000000e+00> : vector<256x128xf32>
    %25 = tpu.matmul %22, %24, %cst_25 {dimension_numbers = #tpu.dot_dimension_numbers<[1], [0], [0], [1], [0, 0, 1, 1], [], []>} : vector<256x12xbf16>, vector<12x128xbf16>, vector<256x128xf32> -> vector<256x128xf32>
    %c0_26 = arith.constant 0 : index
    %c0_27 = arith.constant 0 : index
    %26 = vector.load %arg6[%c0_26, %c0_27] : memref<256x128xf32, #tpu.memory_space<vmem>>, vector<256x128xf32>
    %27 = arith.addf %26, %25 : vector<256x128xf32>
    %c0_28 = arith.constant 0 : index
    %c0_29 = arith.constant 0 : index
    %28 = vector.load %arg6[%c0_28, %c0_29] : memref<256x128xf32, #tpu.memory_space<vmem>>, vector<256x128xf32>
    tpu.vector_store %arg6[%c0_28, %c0_29], %27 {strides = array<i32>} : memref<256x128xf32, #tpu.memory_space<vmem>>, vector<256x128xf32>,
    %c0_30 = arith.constant 0 : index
    %c0_31 = arith.constant 0 : index
    %29 = vector.load %arg6[%c0_30, %c0_31] : memref<256x128xf32, #tpu.memory_space<vmem>>, vector<256x128xf32>
    %30 = arith.truncf %29 : vector<256x128xf32> to vector<256x128xbf16>
    %c0_32 = arith.constant 0 : index
    %c0_33 = arith.constant 0 : index
    %c0_34 = arith.constant 0 : index
    %31 = vector.load %arg3[%c0_32, %c0_33, %c0_34] : memref<1x256x128xbf16, #tpu.memory_space<vmem>>, vector<1x256x128xbf16>
    %32 = vector.shape_cast %31 : vector<1x256x128xbf16> to vector<256x128xbf16>
    %33 = vector.shape_cast %30 : vector<256x128xbf16> to vector<1x256x128xbf16>
    tpu.vector_store %arg3[%c0_32, %c0_33, %c0_34], %33 {strides = array<i32>} : memref<1x256x128xbf16, #tpu.memory_space<vmem>>, vector<1x256x128xbf16>,
    %cst_35 = arith.constant dense<0.000000e+00> : vector<128xf32>
    %34 = vector.multi_reduction <add>, %29, %cst_35 [0] : vector<256x128xf32> to vector<128xf32>
    %35 = vector.shape_cast %34 : vector<128xf32> to vector<1x128xf32>
    %c0_36 = arith.constant 0 : index
    %c0_37 = arith.constant 0 : index
    %c0_38 = arith.constant 0 : index
    %36 = vector.load %arg4[%c0_36, %c0_37, %c0_38] : memref<1x1x128xf32, #tpu.memory_space<vmem>>, vector<1x1x128xf32>
    %37 = vector.shape_cast %36 : vector<1x1x128xf32> to vector<1x128xf32>
    %38 = vector.shape_cast %35 : vector<1x128xf32> to vector<1x1x128xf32>
    tpu.vector_store %arg4[%c0_36, %c0_37, %c0_38], %38 {strides = array<i32>} : memref<1x1x128xf32, #tpu.memory_space<vmem>>, vector<1x1x128xf32>,
    %39 = arith.mulf %29, %29 : vector<256x128xf32>
    %cst_39 = arith.constant dense<0.000000e+00> : vector<128xf32>
    %40 = vector.multi_reduction <add>, %39, %cst_39 [0] : vector<256x128xf32> to vector<128xf32>
    %41 = vector.shape_cast %40 : vector<128xf32> to vector<1x128xf32>
    %c0_40 = arith.constant 0 : index
    %c0_41 = arith.constant 0 : index
    %c0_42 = arith.constant 0 : index
    %42 = vector.load %arg5[%c0_40, %c0_41, %c0_42] : memref<1x1x128xf32, #tpu.memory_space<vmem>>, vector<1x1x128xf32>
    %43 = vector.shape_cast %42 : vector<1x1x128xf32> to vector<1x128xf32>
    %44 = vector.shape_cast %41 : vector<1x128xf32> to vector<1x1x128xf32>
    tpu.vector_store %arg5[%c0_40, %c0_41, %c0_42], %44 {strides = array<i32>} : memref<1x1x128xf32, #tpu.memory_space<vmem>>, vector<1x1x128xf32>,
    return
  }
  func.func @transform_0(%arg0: i32) -> (i32, i32, i32, i32) {
    %c0_i32 = arith.constant 0 : i32
    %c0_i32_0 = arith.constant 0 : i32
    %c0_i32_1 = arith.constant 0 : i32
    %c0_i32_2 = arith.constant 0 : i32
    return %arg0, %c0_i32, %c0_i32_0, %c0_i32_1 : i32, i32, i32, i32
  }
  func.func @transform_1(%arg0: i32) -> (i32, i32, i32) {
    %c0_i32 = arith.constant 0 : i32
    %c0_i32_0 = arith.constant 0 : i32
    %c0_i32_1 = arith.constant 0 : i32
    %c0_i32_2 = arith.constant 0 : i32
    return %c0_i32, %c0_i32_0, %c0_i32_1 : i32, i32, i32
  }
  func.func @transform_2(%arg0: i32) -> (i32, i32, i32) {
    %c0_i32 = arith.constant 0 : i32
    %c0_i32_0 = arith.constant 0 : i32
    %c0_i32_1 = arith.constant 0 : i32
    return %arg0, %c0_i32, %c0_i32_0 : i32, i32, i32
  }
  func.func @transform_3(%arg0: i32) -> (i32, i32, i32) {
    %c0_i32 = arith.constant 0 : i32
    %c0_i32_0 = arith.constant 0 : i32
    %c0_i32_1 = arith.constant 0 : i32
    return %arg0, %c0_i32, %c0_i32_0 : i32, i32, i32
  }
  func.func @transform_4(%arg0: i32) -> (i32, i32, i32) {
    %c0_i32 = arith.constant 0 : i32
    %c0_i32_0 = arith.constant 0 : i32
    %c0_i32_1 = arith.constant 0 : i32
    return %arg0, %c0_i32, %c0_i32_0 : i32, i32, i32
  }
}

module attributes {stable_mosaic.version = 11 : i64} {
  func.func @norm_relu_kernel(%arg0: i32, %arg1: memref<512x128xbf16, #tpu.memory_space<vmem>>, %arg2: memref<1x128xf32, #tpu.memory_space<vmem>>, %arg3: memref<1x128xf32, #tpu.memory_space<vmem>>, %arg4: memref<512x128xf32, #tpu.memory_space<vmem>>) attributes {dimension_semantics = [#tpu.dimension_semantics<parallel>], iteration_bounds = array<i64: 1>, scalar_prefetch = 0 : i64, scratch_operands = 0 : i64, tpu.core_type = #tpu.core_type<tc>, window_params = [{transform_indices = @transform_0, window_bounds = array<i64: 512, 128>}, {pipeline_mode = #tpu.pipeline_mode<synchronous>, transform_indices = @transform_1, window_bounds = array<i64: 1, 128>}, {pipeline_mode = #tpu.pipeline_mode<synchronous>, transform_indices = @transform_2, window_bounds = array<i64: 1, 128>}, {transform_indices = @transform_3, window_bounds = array<i64: 512, 128>}]} {
    %c0 = arith.constant 0 : index
    %c0_0 = arith.constant 0 : index
    %0 = vector.load %arg1[%c0, %c0_0] : memref<512x128xbf16, #tpu.memory_space<vmem>>, vector<512x128xbf16>
    %1 = arith.extf %0 : vector<512x128xbf16> to vector<512x128xf32>
    %c0_1 = arith.constant 0 : index
    %c0_2 = arith.constant 0 : index
    %2 = vector.load %arg2[%c0_1, %c0_2] : memref<1x128xf32, #tpu.memory_space<vmem>>, vector<1x128xf32>
    %3 = vector.broadcast %2 : vector<1x128xf32> to vector<512x128xf32>
    %4 = arith.mulf %1, %3 : vector<512x128xf32>
    %c0_3 = arith.constant 0 : index
    %c0_4 = arith.constant 0 : index
    %5 = vector.load %arg3[%c0_3, %c0_4] : memref<1x128xf32, #tpu.memory_space<vmem>>, vector<1x128xf32>
    %6 = vector.broadcast %5 : vector<1x128xf32> to vector<512x128xf32>
    %7 = arith.addf %4, %6 : vector<512x128xf32>
    %cst = arith.constant 0.000000e+00 : f32
    %8 = vector.broadcast %cst : f32 to vector<512x128xf32>
    %9 = arith.maximumf %7, %8 : vector<512x128xf32>
    %c0_5 = arith.constant 0 : index
    %c0_6 = arith.constant 0 : index
    %10 = vector.load %arg4[%c0_5, %c0_6] : memref<512x128xf32, #tpu.memory_space<vmem>>, vector<512x128xf32>
    tpu.vector_store %arg4[%c0_5, %c0_6], %9 {strides = array<i32>} : memref<512x128xf32, #tpu.memory_space<vmem>>, vector<512x128xf32>,
    return
  }
  func.func @transform_0(%arg0: i32) -> (i32, i32) {
    %c0_i32 = arith.constant 0 : i32
    %c0_i32_0 = arith.constant 0 : i32
    return %arg0, %c0_i32 : i32, i32
  }
  func.func @transform_1(%arg0: i32) -> (i32, i32) {
    %c0_i32 = arith.constant 0 : i32
    %c0_i32_0 = arith.constant 0 : i32
    %c0_i32_1 = arith.constant 0 : i32
    return %c0_i32, %c0_i32_0 : i32, i32
  }
  func.func @transform_2(%arg0: i32) -> (i32, i32) {
    %c0_i32 = arith.constant 0 : i32
    %c0_i32_0 = arith.constant 0 : i32
    %c0_i32_1 = arith.constant 0 : i32
    return %c0_i32, %c0_i32_0 : i32, i32
  }
  func.func @transform_3(%arg0: i32) -> (i32, i32) {
    %c0_i32 = arith.constant 0 : i32
    %c0_i32_0 = arith.constant 0 : i32
    return %arg0, %c0_i32 : i32, i32
  }
}

</mosaic_0001>

<llo_original>
// kernel: conv_bn_relu.3
$region0: #{conv_bn_relu.3}
  #allocation0 [shape = 'u32[]', space=smem, size = 0x4, offset = 0x4, fixed_abs, tag = 'smem constant byte address 0x4 - core index']
  #allocation1 [shape = 'u32[144,128]{1,0:T(1,128)}', space=vmem, size = 0x12000, scoped, tag = 'internal scratch']
  %s0 = inlined_call_operand.vmem [shape: bf16[512,128], index: 0, kind: input, shape index: {}]
  %s1 = inlined_call_operand.vmem [shape: f32[1,128], index: 1, kind: input, shape index: {}]
  %s2 = inlined_call_operand.vmem [shape: f32[1,128], index: 2, kind: input, shape index: {}]
  %s3 = inlined_call_operand.vmem [shape: f32[512,128], index: 3, kind: output, shape index: {}]
  %s4 = sld [smem:[#allocation0]]
  $region22: #{conv_bn_relu.3} parent=0
    _
  %s6 = ssub.s32 1, %s4
  %s7 = scalar_select 0, %s6, %s4
  // Predicated region
  $region2: #{conv_bn_relu.3} parent=0 // pred_check
    _
  $region3: #{conv_bn_relu.3} parent=0 // pred_check_branch
    %9 = sbr.rel (0) target = $region5
  $region4: #{conv_bn_relu.3} parent=0 // pred_region
    _
  $region5: #{conv_bn_relu.3} parent=0 // pred_fallthru
    _
  // Predicated region
  $region6: #{conv_bn_relu.3} parent=0 // pred_check
    _
  $region7: #{conv_bn_relu.3} parent=0 // pred_check_branch
    %11 = sbr.rel (0) target = $region9
  $region8: #{conv_bn_relu.3} parent=0 // pred_region
    _
  $region9: #{conv_bn_relu.3} parent=0 // pred_fallthru
    _
  // Predicated region
  $region10: #{conv_bn_relu.3} parent=0 // pred_check
    _
  $region11: #{conv_bn_relu.3} parent=0 // pred_check_branch
    %13 = sbr.rel (0) target = $region13
  $region12: #{conv_bn_relu.3} parent=0 // pred_region
    _
  $region13: #{conv_bn_relu.3} parent=0 // pred_fallthru
    _
  %v14 = vld [vmem:[%s0] sm:$0xf]
  %v15 = vld [vmem:[%s0 + $0x4] sm:$0xf]
  %v16 = vld [vmem:[%s0 + $0x8] sm:$0xf]
  %v17 = vld [vmem:[%s0 + $0xc] sm:$0xf]
  %v18 = vld [vmem:[%s0 + $0x10] sm:$0xf]
  %v19 = vld [vmem:[%s0 + $0x14] sm:$0xf]
  %v20 = vld [vmem:[%s0 + $0x18] sm:$0xf]
  %v21 = vld [vmem:[%s0 + $0x1c] sm:$0xf]
  %v22 = vld [vmem:[%s0 + $0x20] sm:$0xf]
  %v23 = vld [vmem:[%s0 + $0x24] sm:$0xf]
  %v24 = vld [vmem:[%s0 + $0x28] sm:$0xf]
  %v25 = vld [vmem:[%s0 + $0x2c] sm:$0xf]
  %v26 = vld [vmem:[%s0 + $0x30] sm:$0xf]
  %v27 = vld [vmem:[%s0 + $0x34] sm:$0xf]
  %v28 = vld [vmem:[%s0 + $0x38] sm:$0xf]
  %v29 = vld [vmem:[%s0 + $0x3c] sm:$0xf]
  %v30 = vld [vmem:[%s0 + $0x40] sm:$0xf]
  %v31 = vld [vmem:[%s0 + $0x44] sm:$0xf]
  %v32 = vld [vmem:[%s0 + $0x48] sm:$0xf]
  %v33 = vld [vmem:[%s0 + $0x4c] sm:$0xf]
  %v34 = vld [vmem:[%s0 + $0x50] sm:$0xf]
  %v35 = vld [vmem:[%s0 + $0x54] sm:$0xf]
  %v36 = vld [vmem:[%s0 + $0x58] sm:$0xf]
  %v37 = vld [vmem:[%s0 + $0x5c] sm:$0xf]
  %v38 = vld [vmem:[%s0 + $0x60] sm:$0xf]
  %v39 = vld [vmem:[%s0 + $0x64] sm:$0xf]
  %v40 = vld [vmem:[%s0 + $0x68] sm:$0xf]
  %v41 = vld [vmem:[%s0 + $0x6c] sm:$0xf]
  %v42 = vld [vmem:[%s0 + $0x70] sm:$0xf]
  %v43 = vld [vmem:[%s0 + $0x74] sm:$0xf]
  %v44 = vld [vmem:[%s0 + $0x78] sm:$0xf]
  %v45 = vld [vmem:[%s0 + $0x7c] sm:$0xf]
  %v46 = vld [vmem:[%s0 + $0x80] sm:$0xf]
  %v47 = vld [vmem:[%s0 + $0x84] sm:$0xf]
  %v48 = vld [vmem:[%s0 + $0x88] sm:$0xf]
  %v49 = vld [vmem:[%s0 + $0x8c] sm:$0xf]
  %v50 = vld [vmem:[%s0 + $0x90] sm:$0xf]
  %v51 = vld [vmem:[%s0 + $0x94] sm:$0xf]
  %v52 = vld [vmem:[%s0 + $0x98] sm:$0xf]
  %v53 = vld [vmem:[%s0 + $0x9c] sm:$0xf]
  %v54 = vld [vmem:[%s0 + $0xa0] sm:$0xf]
  %v55 = vld [vmem:[%s0 + $0xa4] sm:$0xf]
  %v56 = vld [vmem:[%s0 + $0xa8] sm:$0xf]
  %v57 = vld [vmem:[%s0 + $0xac] sm:$0xf]
  %v58 = vld [vmem:[%s0 + $0xb0] sm:$0xf]
  %v59 = vld [vmem:[%s0 + $0xb4] sm:$0xf]
  %v60 = vld [vmem:[%s0 + $0xb8] sm:$0xf]
  %v61 = vld [vmem:[%s0 + $0xbc] sm:$0xf]
  %v62 = vld [vmem:[%s0 + $0xc0] sm:$0xf]
  %v63 = vld [vmem:[%s0 + $0xc4] sm:$0xf]
  %v64 = vld [vmem:[%s0 + $0xc8] sm:$0xf]
  %v65 = vld [vmem:[%s0 + $0xcc] sm:$0xf]
  %v66 = vld [vmem:[%s0 + $0xd0] sm:$0xf]
  %v67 = vld [vmem:[%s0 + $0xd4] sm:$0xf]
  %v68 = vld [vmem:[%s0 + $0xd8] sm:$0xf]
  %v69 = vld [vmem:[%s0 + $0xdc] sm:$0xf]
  %v70 = vld [vmem:[%s0 + $0xe0] sm:$0xf]
  %v71 = vld [vmem:[%s0 + $0xe4] sm:$0xf]
  %v72 = vld [vmem:[%s0 + $0xe8] sm:$0xf]
  %v73 = vld [vmem:[%s0 + $0xec] sm:$0xf]
  %v74 = vld [vmem:[%s0 + $0xf0] sm:$0xf]
  %v75 = vld [vmem:[%s0 + $0xf4] sm:$0xf]
  %v76 = vld [vmem:[%s0 + $0xf8] sm:$0xf]
  %v77 = vld [vmem:[%s0 + $0xfc] sm:$0xf]
  %v78 = vunpack.c.l.bf16 %v14
  %v79 = vunpack.c.l.bf16 %v15
  %v80 = vunpack.c.l.bf16 %v16
  %v81 = vunpack.c.l.bf16 %v17
  %v82 = vunpack.c.l.bf16 %v18
  %v83 = vunpack.c.l.bf16 %v19
  %v84 = vunpack.c.l.bf16 %v20
  %v85 = vunpack.c.l.bf16 %v21
  %v86 = vunpack.c.l.bf16 %v22
  %v87 = vunpack.c.l.bf16 %v23
  %v88 = vunpack.c.l.bf16 %v24
  %v89 = vunpack.c.l.bf16 %v25
  %v90 = vunpack.c.l.bf16 %v26
  %v91 = vunpack.c.l.bf16 %v27
  %v92 = vunpack.c.l.bf16 %v28
  %v93 = vunpack.c.l.bf16 %v29
  %v94 = vunpack.c.l.bf16 %v30
  %v95 = vunpack.c.l.bf16 %v31
  %v96 = vunpack.c.l.bf16 %v32
  %v97 = vunpack.c.l.bf16 %v33
  %v98 = vunpack.c.l.bf16 %v34
  %v99 = vunpack.c.l.bf16 %v35
  %v100 = vunpack.c.l.bf16 %v36
  %v101 = vunpack.c.l.bf16 %v37
  %v102 = vunpack.c.l.bf16 %v38
  %v103 = vunpack.c.l.bf16 %v39
  %v104 = vunpack.c.l.bf16 %v40
  %v105 = vunpack.c.l.bf16 %v41
  %v106 = vunpack.c.l.bf16 %v42
  %v107 = vunpack.c.l.bf16 %v43
  %v108 = vunpack.c.l.bf16 %v44
  %v109 = vunpack.c.l.bf16 %v45
  %v110 = vunpack.c.l.bf16 %v46
  %v111 = vunpack.c.l.bf16 %v47
  %v112 = vunpack.c.l.bf16 %v48
  %v113 = vunpack.c.l.bf16 %v49
  %v114 = vunpack.c.l.bf16 %v50
  %v115 = vunpack.c.l.bf16 %v51
  %v116 = vunpack.c.l.bf16 %v52
  %v117 = vunpack.c.l.bf16 %v53
  %v118 = vunpack.c.l.bf16 %v54
  %v119 = vunpack.c.l.bf16 %v55
  %v120 = vunpack.c.l.bf16 %v56
  %v121 = vunpack.c.l.bf16 %v57
  %v122 = vunpack.c.l.bf16 %v58
  %v123 = vunpack.c.l.bf16 %v59
  %v124 = vunpack.c.l.bf16 %v60
  %v125 = vunpack.c.l.bf16 %v61
  %v126 = vunpack.c.l.bf16 %v62
  %v127 = vunpack.c.l.bf16 %v63
  %v128 = vunpack.c.l.bf16 %v64
  %v129 = vunpack.c.l.bf16 %v65
  %v130 = vunpack.c.l.bf16 %v66
  %v131 = vunpack.c.l.bf16 %v67
  %v132 = vunpack.c.l.bf16 %v68
  %v133 = vunpack.c.l.bf16 %v69
  %v134 = vunpack.c.l.bf16 %v70
  %v135 = vunpack.c.l.bf16 %v71
  %v136 = vunpack.c.l.bf16 %v72
  %v137 = vunpack.c.l.bf16 %v73
  %v138 = vunpack.c.l.bf16 %v74
  %v139 = vunpack.c.l.bf16 %v75
  %v140 = vunpack.c.l.bf16 %v76
  %v141 = vunpack.c.l.bf16 %v77
  %v142 = vld [vmem:[%s1] sm:$0x1]
  %v144 = vlaneseq
  %v145 = vshrl.u32 %v144, 7
  %v146 = vsub.s32 0, %v145
  %v147 = vrot.slane %v142, %v146
  %v149 = vmul.f32 %v78, %v147
  %v150 = vmul.f32 %v79, %v147
  %v151 = vmul.f32 %v80, %v147
  %v152 = vmul.f32 %v81, %v147
  %v153 = vmul.f32 %v82, %v147
  %v154 = vmul.f32 %v83, %v147
  %v155 = vmul.f32 %v84, %v147
  %v156 = vmul.f32 %v85, %v147
  %v157 = vmul.f32 %v86, %v147
  %v158 = vmul.f32 %v87, %v147
  %v159 = vmul.f32 %v88, %v147
  %v160 = vmul.f32 %v89, %v147
  %v161 = vmul.f32 %v90, %v147
  %v162 = vmul.f32 %v91, %v147
  %v163 = vmul.f32 %v92, %v147
  %v164 = vmul.f32 %v93, %v147
  %v165 = vmul.f32 %v94, %v147
  %v166 = vmul.f32 %v95, %v147
  %v167 = vmul.f32 %v96, %v147
  %v168 = vmul.f32 %v97, %v147
  %v169 = vmul.f32 %v98, %v147
  %v170 = vmul.f32 %v99, %v147
  %v171 = vmul.f32 %v100, %v147
  %v172 = vmul.f32 %v101, %v147
  %v173 = vmul.f32 %v102, %v147
  %v174 = vmul.f32 %v103, %v147
  %v175 = vmul.f32 %v104, %v147
  %v176 = vmul.f32 %v105, %v147
  %v177 = vmul.f32 %v106, %v147
  %v178 = vmul.f32 %v107, %v147
  %v179 = vmul.f32 %v108, %v147
  %v180 = vmul.f32 %v109, %v147
  %v181 = vmul.f32 %v110, %v147
  %v182 = vmul.f32 %v111, %v147
  %v183 = vmul.f32 %v112, %v147
  %v184 = vmul.f32 %v113, %v147
  %v185 = vmul.f32 %v114, %v147
  %v186 = vmul.f32 %v115, %v147
  %v187 = vmul.f32 %v116, %v147
  %v188 = vmul.f32 %v117, %v147
  %v189 = vmul.f32 %v118, %v147
  %v190 = vmul.f32 %v119, %v147
  %v191 = vmul.f32 %v120, %v147
  %v192 = vmul.f32 %v121, %v147
  %v193 = vmul.f32 %v122, %v147
  %v194 = vmul.f32 %v123, %v147
  %v195 = vmul.f32 %v124, %v147
  %v196 = vmul.f32 %v125, %v147
  %v197 = vmul.f32 %v126, %v147
  %v198 = vmul.f32 %v127, %v147
  %v199 = vmul.f32 %v128, %v147
  %v200 = vmul.f32 %v129, %v147
  %v201 = vmul.f32 %v130, %v147
  %v202 = vmul.f32 %v131, %v147
  %v203 = vmul.f32 %v132, %v147
  %v204 = vmul.f32 %v133, %v147
  %v205 = vmul.f32 %v134, %v147
  %v206 = vmul.f32 %v135, %v147
  %v207 = vmul.f32 %v136, %v147
  %v208 = vmul.f32 %v137, %v147
  %v209 = vmul.f32 %v138, %v147
  %v210 = vmul.f32 %v139, %v147
  %v211 = vmul.f32 %v140, %v147
  %v212 = vmul.f32 %v141, %v147
  %v213 = vld [vmem:[%s2] sm:$0x1]
  %v215 = vlaneseq
  %v216 = vshrl.u32 %v215, 7
  %v217 = vsub.s32 0, %v216
  %v218 = vrot.slane %v213, %v217
  %v220 = vadd.f32 %v149, %v218
  %v221 = vadd.f32 %v150, %v218
  %v222 = vadd.f32 %v151, %v218
  %v223 = vadd.f32 %v152, %v218
  %v224 = vadd.f32 %v153, %v218
  %v225 = vadd.f32 %v154, %v218
  %v226 = vadd.f32 %v155, %v218
  %v227 = vadd.f32 %v156, %v218
  %v228 = vadd.f32 %v157, %v218
  %v229 = vadd.f32 %v158, %v218
  %v230 = vadd.f32 %v159, %v218
  %v231 = vadd.f32 %v160, %v218
  %v232 = vadd.f32 %v161, %v218
  %v233 = vadd.f32 %v162, %v218
  %v234 = vadd.f32 %v163, %v218
  %v235 = vadd.f32 %v164, %v218
  %v236 = vadd.f32 %v165, %v218
  %v237 = vadd.f32 %v166, %v218
  %v238 = vadd.f32 %v167, %v218
  %v239 = vadd.f32 %v168, %v218
  %v240 = vadd.f32 %v169, %v218
  %v241 = vadd.f32 %v170, %v218
  %v242 = vadd.f32 %v171, %v218
  %v243 = vadd.f32 %v172, %v218
  %v244 = vadd.f32 %v173, %v218
  %v245 = vadd.f32 %v174, %v218
  %v246 = vadd.f32 %v175, %v218
  %v247 = vadd.f32 %v176, %v218
  %v248 = vadd.f32 %v177, %v218
  %v249 = vadd.f32 %v178, %v218
  %v250 = vadd.f32 %v179, %v218
  %v251 = vadd.f32 %v180, %v218
  %v252 = vadd.f32 %v181, %v218
  %v253 = vadd.f32 %v182, %v218
  %v254 = vadd.f32 %v183, %v218
  %v255 = vadd.f32 %v184, %v218
  %v256 = vadd.f32 %v185, %v218
  %v257 = vadd.f32 %v186, %v218
  %v258 = vadd.f32 %v187, %v218
  %v259 = vadd.f32 %v188, %v218
  %v260 = vadd.f32 %v189, %v218
  %v261 = vadd.f32 %v190, %v218
  %v262 = vadd.f32 %v191, %v218
  %v263 = vadd.f32 %v192, %v218
  %v264 = vadd.f32 %v193, %v218
  %v265 = vadd.f32 %v194, %v218
  %v266 = vadd.f32 %v195, %v218
  %v267 = vadd.f32 %v196, %v218
  %v268 = vadd.f32 %v197, %v218
  %v269 = vadd.f32 %v198, %v218
  %v270 = vadd.f32 %v199, %v218
  %v271 = vadd.f32 %v200, %v218
  %v272 = vadd.f32 %v201, %v218
  %v273 = vadd.f32 %v202, %v218
  %v274 = vadd.f32 %v203, %v218
  %v275 = vadd.f32 %v204, %v218
  %v276 = vadd.f32 %v205, %v218
  %v277 = vadd.f32 %v206, %v218
  %v278 = vadd.f32 %v207, %v218
  %v279 = vadd.f32 %v208, %v218
  %v280 = vadd.f32 %v209, %v218
  %v281 = vadd.f32 %v210, %v218
  %v282 = vadd.f32 %v211, %v218
  %v283 = vadd.f32 %v212, %v218
  %v284 = vmax.f32 %v220, 0.0
  %v285 = vmax.f32 %v221, 0.0
  %v286 = vmax.f32 %v222, 0.0
  %v287 = vmax.f32 %v223, 0.0
  %v288 = vmax.f32 %v224, 0.0
  %v289 = vmax.f32 %v225, 0.0
  %v290 = vmax.f32 %v226, 0.0
  %v291 = vmax.f32 %v227, 0.0
  %v292 = vmax.f32 %v228, 0.0
  %v293 = vmax.f32 %v229, 0.0
  %v294 = vmax.f32 %v230, 0.0
  %v295 = vmax.f32 %v231, 0.0
  %v296 = vmax.f32 %v232, 0.0
  %v297 = vmax.f32 %v233, 0.0
  %v298 = vmax.f32 %v234, 0.0
  %v299 = vmax.f32 %v235, 0.0
  %v300 = vmax.f32 %v236, 0.0
  %v301 = vmax.f32 %v237, 0.0
  %v302 = vmax.f32 %v238, 0.0
  %v303 = vmax.f32 %v239, 0.0
  %v304 = vmax.f32 %v240, 0.0
  %v305 = vmax.f32 %v241, 0.0
  %v306 = vmax.f32 %v242, 0.0
  %v307 = vmax.f32 %v243, 0.0
  %v308 = vmax.f32 %v244, 0.0
  %v309 = vmax.f32 %v245, 0.0
  %v310 = vmax.f32 %v246, 0.0
  %v311 = vmax.f32 %v247, 0.0
  %v312 = vmax.f32 %v248, 0.0
  %v313 = vmax.f32 %v249, 0.0
  %v314 = vmax.f32 %v250, 0.0
  %v315 = vmax.f32 %v251, 0.0
  %v316 = vmax.f32 %v252, 0.0
  %v317 = vmax.f32 %v253, 0.0
  %v318 = vmax.f32 %v254, 0.0
  %v319 = vmax.f32 %v255, 0.0
  %v320 = vmax.f32 %v256, 0.0
  %v321 = vmax.f32 %v257, 0.0
  %v322 = vmax.f32 %v258, 0.0
  %v323 = vmax.f32 %v259, 0.0
  %v324 = vmax.f32 %v260, 0.0
  %v325 = vmax.f32 %v261, 0.0
  %v326 = vmax.f32 %v262, 0.0
  %v327 = vmax.f32 %v263, 0.0
  %v328 = vmax.f32 %v264, 0.0
  %v329 = vmax.f32 %v265, 0.0
  %v330 = vmax.f32 %v266, 0.0
  %v331 = vmax.f32 %v267, 0.0
  %v332 = vmax.f32 %v268, 0.0
  %v333 = vmax.f32 %v269, 0.0
  %v334 = vmax.f32 %v270, 0.0
  %v335 = vmax.f32 %v271, 0.0
  %v336 = vmax.f32 %v272, 0.0
  %v337 = vmax.f32 %v273, 0.0
  %v338 = vmax.f32 %v274, 0.0
  %v339 = vmax.f32 %v275, 0.0
  %v340 = vmax.f32 %v276, 0.0
  %v341 = vmax.f32 %v277, 0.0
  %v342 = vmax.f32 %v278, 0.0
  %v343 = vmax.f32 %v279, 0.0
  %v344 = vmax.f32 %v280, 0.0
  %v345 = vmax.f32 %v281, 0.0
  %v346 = vmax.f32 %v282, 0.0
  %v347 = vmax.f32 %v283, 0.0
  %348 = vst [vmem:[%s3] sm:$0xff] %v284
  %349 = vst [vmem:[%s3 + $0x8] sm:$0xff] %v285
  %350 = vst [vmem:[%s3 + $0x10] sm:$0xff] %v286
  %351 = vst [vmem:[%s3 + $0x18] sm:$0xff] %v287
  %352 = vst [vmem:[%s3 + $0x20] sm:$0xff] %v288
  %353 = vst [vmem:[%s3 + $0x28] sm:$0xff] %v289
  %354 = vst [vmem:[%s3 + $0x30] sm:$0xff] %v290
  %355 = vst [vmem:[%s3 + $0x38] sm:$0xff] %v291
  %356 = vst [vmem:[%s3 + $0x40] sm:$0xff] %v292
  %357 = vst [vmem:[%s3 + $0x48] sm:$0xff] %v293
  %358 = vst [vmem:[%s3 + $0x50] sm:$0xff] %v294
  %359 = vst [vmem:[%s3 + $0x58] sm:$0xff] %v295
  %360 = vst [vmem:[%s3 + $0x60] sm:$0xff] %v296
  %361 = vst [vmem:[%s3 + $0x68] sm:$0xff] %v297
  %362 = vst [vmem:[%s3 + $0x70] sm:$0xff] %v298
  %363 = vst [vmem:[%s3 + $0x78] sm:$0xff] %v299
  %364 = vst [vmem:[%s3 + $0x80] sm:$0xff] %v300
  %365 = vst [vmem:[%s3 + $0x88] sm:$0xff] %v301
  %366 = vst [vmem:[%s3 + $0x90] sm:$0xff] %v302
  %367 = vst [vmem:[%s3 + $0x98] sm:$0xff] %v303
  %368 = vst [vmem:[%s3 + $0xa0] sm:$0xff] %v304
  %369 = vst [vmem:[%s3 + $0xa8] sm:$0xff] %v305
  %370 = vst [vmem:[%s3 + $0xb0] sm:$0xff] %v306
  %371 = vst [vmem:[%s3 + $0xb8] sm:$0xff] %v307
  %372 = vst [vmem:[%s3 + $0xc0] sm:$0xff] %v308
  %373 = vst [vmem:[%s3 + $0xc8] sm:$0xff] %v309
  %374 = vst [vmem:[%s3 + $0xd0] sm:$0xff] %v310
  %375 = vst [vmem:[%s3 + $0xd8] sm:$0xff] %v311
  %376 = vst [vmem:[%s3 + $0xe0] sm:$0xff] %v312
  %377 = vst [vmem:[%s3 + $0xe8] sm:$0xff] %v313
  %378 = vst [vmem:[%s3 + $0xf0] sm:$0xff] %v314
  %379 = vst [vmem:[%s3 + $0xf8] sm:$0xff] %v315
  %380 = vst [vmem:[%s3 + $0x100] sm:$0xff] %v316
  %381 = vst [vmem:[%s3 + $0x108] sm:$0xff] %v317
  %382 = vst [vmem:[%s3 + $0x110] sm:$0xff] %v318
  %383 = vst [vmem:[%s3 + $0x118] sm:$0xff] %v319
  %384 = vst [vmem:[%s3 + $0x120] sm:$0xff] %v320
  %385 = vst [vmem:[%s3 + $0x128] sm:$0xff] %v321
  %386 = vst [vmem:[%s3 + $0x130] sm:$0xff] %v322
  %387 = vst [vmem:[%s3 + $0x138] sm:$0xff] %v323
  %388 = vst [vmem:[%s3 + $0x140] sm:$0xff] %v324
  %389 = vst [vmem:[%s3 + $0x148] sm:$0xff] %v325
  %390 = vst [vmem:[%s3 + $0x150] sm:$0xff] %v326
  %391 = vst [vmem:[%s3 + $0x158] sm:$0xff] %v327
  %392 = vst [vmem:[%s3 + $0x160] sm:$0xff] %v328
  %393 = vst [vmem:[%s3 + $0x168] sm:$0xff] %v329
  %394 = vst [vmem:[%s3 + $0x170] sm:$0xff] %v330
  %395 = vst [vmem:[%s3 + $0x178] sm:$0xff] %v331
  %396 = vst [vmem:[%s3 + $0x180] sm:$0xff] %v332
  %397 = vst [vmem:[%s3 + $0x188] sm:$0xff] %v333
  %398 = vst [vmem:[%s3 + $0x190] sm:$0xff] %v334
  %399 = vst [vmem:[%s3 + $0x198] sm:$0xff] %v335
  %400 = vst [vmem:[%s3 + $0x1a0] sm:$0xff] %v336
  %401 = vst [vmem:[%s3 + $0x1a8] sm:$0xff] %v337
  %402 = vst [vmem:[%s3 + $0x1b0] sm:$0xff] %v338
  %403 = vst [vmem:[%s3 + $0x1b8] sm:$0xff] %v339
  %404 = vst [vmem:[%s3 + $0x1c0] sm:$0xff] %v340
  %405 = vst [vmem:[%s3 + $0x1c8] sm:$0xff] %v341
  %406 = vst [vmem:[%s3 + $0x1d0] sm:$0xff] %v342
  %407 = vst [vmem:[%s3 + $0x1d8] sm:$0xff] %v343
  %408 = vst [vmem:[%s3 + $0x1e0] sm:$0xff] %v344
  %409 = vst [vmem:[%s3 + $0x1e8] sm:$0xff] %v345
  %410 = vst [vmem:[%s3 + $0x1f0] sm:$0xff] %v346
  %411 = vst [vmem:[%s3 + $0x1f8] sm:$0xff] %v347
  // Predicated region
  $region14: #{conv_bn_relu.3} parent=0 // pred_check
    _
  $region15: #{conv_bn_relu.3} parent=0 // pred_check_branch
    %413 = sbr.rel (0) target = $region17
  $region16: #{conv_bn_relu.3} parent=0 // pred_region
    _
  $region17: #{conv_bn_relu.3} parent=0 // pred_fallthru
    _
  // Predicated region
  $region18: #{conv_bn_relu.3} parent=0 // pred_check
    _
  $region19: #{conv_bn_relu.3} parent=0 // pred_check_branch
    %415 = sbr.rel (0) target = $region21
  $region20: #{conv_bn_relu.3} parent=0 // pred_region
    _
  $region21: #{conv_bn_relu.3} parent=0 // pred_fallthru
    _

// kernel: conv_bn_relu.2
$region0: #{conv_bn_relu.2}
  #allocation0 [shape = 'u32[]', space=smem, size = 0x4, offset = 0x4, fixed_abs, tag = 'smem constant byte address 0x4 - core index']
  #allocation1 [shape = 'u32[144,128]{1,0:T(1,128)}', space=vmem, size = 0x12000, scoped, tag = 'internal scratch']
  #allocation2 [shape = 'f32[256,128]{1,0:T(8,128)}', space=vmem, size = 0x20000, scoped, tag = 'scratch operand']
  %s0 = inlined_call_operand.vmem [shape: bf16[2,18,18,4], index: 0, kind: input, shape index: {}]
  %s1 = inlined_call_operand.vmem [shape: bf16[3,12,128], index: 1, kind: input, shape index: {}]
  %s2 = inlined_call_operand.vmem [shape: bf16[2,256,128], index: 2, kind: output, shape index: {0}]
  %s3 = inlined_call_operand.vmem [shape: f32[2,1,128], index: 3, kind: output, shape index: {1}]
  %s4 = inlined_call_operand.vmem [shape: f32[2,1,128], index: 4, kind: output, shape index: {2}]
  %5 = xla_tuple %s2, %s3, %s4
  %s6 = sld [smem:[#allocation0]]
  $region57: #{conv_bn_relu.2} parent=0
    _
  %s8 = ssub.s32 1, %s6
  %s9 = scalar_select 0, %s8, %s6
  loop: start=0, step=1, limit=4
  $region2: #{conv_bn_relu.2} parent=0 // loop_pre_header
    _
  $region3: #{conv_bn_relu.2} parent=0 // loop_header
    %s11 = sphi 0, %s15
    %p12 = scmp.ge.s32.totalorder %s11, 4
    %s21 = sphi 0, %s23
    %s24 = sphi 0, %s21
    %s25 = sphi 0, %s24
    %s41 = sphi 0, %s25
    %s45 = sphi 0, %s45
    %s47 = sphi 0, %s45
    %s48 = sphi 0, %s47
    %s62 = sphi 0, %s48
    %s68 = sphi 0, %s70
    %s71 = sphi 0, %s68
    %s72 = sphi 0, %s71
    %s88 = sphi 0, %s72
    %s94 = sphi 0, %s96
    %s97 = sphi 0, %s94
    %s98 = sphi 0, %s97
    %s114 = sphi 0, %s98
    %s120 = sphi 0, %s122
    %s123 = sphi 0, %s120
    %s124 = sphi 0, %s123
    %s140 = sphi 0, %s124
  $region4: #{conv_bn_relu.2} parent=0 // loop_header_branch
    %14 = sbr.rel (%p12) target = $region8
  $region5: #{conv_bn_relu.2} parent=0 // loop_body
    %s16 = ssub.s32 %s11, 1
    %s17 = ssub.s32 %s11, 2
    %s18 = sadd.s32 %s11, 1
    %s19 = ssub.s32 %s11, %s18
    %p20 = scmp.eq.s32.totalorder %s19, 0
    %s22 = sadd.s32 %s21, 1
    %s23 = scalar_select %p20, %s21, %s22
    %p26 = pneg %p20
    %p27 = scmp.eq.s32.totalorder %s11, 1
    %p28 = por %p26, %p27
    %p29 = scmp.ne.s32.totalorder %s21, %s24
    %p30 = scmp.eq.s32.totalorder %s11, 0
    %p31 = por %p29, %p30
    %p32 = scmp.ne.s32.totalorder %s21, %s24
    %p33 = scmp.eq.s32.totalorder %s16, 1
    %p34 = por %p32, %p33
    %p35 = scmp.ne.s32.totalorder %s24, %s25
    %p36 = scmp.eq.s32.totalorder %s16, 0
    %p37 = por %p35, %p36
    %p38 = scmp.ne.s32.totalorder %s24, %s25
    %p39 = scmp.eq.s32.totalorder %s17, 1
    %p40 = por %p38, %p39
    %p42 = scmp.ne.s32.totalorder %s25, %s41
    %p43 = scmp.eq.s32.totalorder %s17, 0
    %p44 = por %p42, %p43
    %s46 = sadd.s32 %s45, 1
    %p49 = scmp.eq.s32.totalorder %s11, 1
    %p50 = scmp.ne.s32.totalorder %s45, %s47
    %p51 = scmp.eq.s32.totalorder %s11, 0
    %p52 = por %p50, %p51
    %p53 = scmp.ne.s32.totalorder %s45, %s47
    %p54 = scmp.eq.s32.totalorder %s16, 1
    %p55 = por %p53, %p54
    %p56 = scmp.ne.s32.totalorder %s47, %s48
    %p57 = scmp.eq.s32.totalorder %s16, 0
    %p58 = por %p56, %p57
    %p59 = scmp.ne.s32.totalorder %s47, %s48
    %p60 = scmp.eq.s32.totalorder %s17, 1
    %p61 = por %p59, %p60
    %p63 = scmp.ne.s32.totalorder %s48, %s62
    %p64 = scmp.eq.s32.totalorder %s17, 0
    %p65 = por %p63, %p64
    %s66 = ssub.s32 %s11, %s18
    %p67 = scmp.eq.s32.totalorder %s66, 0
    %s69 = sadd.s32 %s68, 1
    %s70 = scalar_select %p67, %s68, %s69
    %p73 = pneg %p67
    %p74 = scmp.eq.s32.totalorder %s11, 1
    %p75 = por %p73, %p74
    %p76 = scmp.ne.s32.totalorder %s68, %s71
    %p77 = scmp.eq.s32.totalorder %s11, 0
    %p78 = por %p76, %p77
    %p79 = scmp.ne.s32.totalorder %s68, %s71
    %p80 = scmp.eq.s32.totalorder %s16, 1
    %p81 = por %p79, %p80
    %p82 = scmp.ne.s32.totalorder %s71, %s72
    %p83 = scmp.eq.s32.totalorder %s16, 0
    %p84 = por %p82, %p83
    %p85 = scmp.ne.s32.totalorder %s71, %s72
    %p86 = scmp.eq.s32.totalorder %s17, 1
    %p87 = por %p85, %p86
    %p89 = scmp.ne.s32.totalorder %s72, %s88
    %p90 = scmp.eq.s32.totalorder %s17, 0
    %p91 = por %p89, %p90
    %s92 = ssub.s32 %s11, %s18
    %p93 = scmp.eq.s32.totalorder %s92, 0
    %s95 = sadd.s32 %s94, 1
    %s96 = scalar_select %p93, %s94, %s95
    %p99 = pneg %p93
    %p100 = scmp.eq.s32.totalorder %s11, 1
    %p101 = por %p99, %p100
    %p102 = scmp.ne.s32.totalorder %s94, %s97
    %p103 = scmp.eq.s32.totalorder %s11, 0
    %p104 = por %p102, %p103
    %p105 = scmp.ne.s32.totalorder %s94, %s97
    %p106 = scmp.eq.s32.totalorder %s16, 1
    %p107 = por %p105, %p106
    %p108 = scmp.ne.s32.totalorder %s97, %s98
    %p109 = scmp.eq.s32.totalorder %s16, 0
    %p110 = por %p108, %p109
    %p111 = scmp.ne.s32.totalorder %s97, %s98
    %p112 = scmp.eq.s32.totalorder %s17, 1
    %p113 = por %p111, %p112
    %p115 = scmp.ne.s32.totalorder %s98, %s114
    %p116 = scmp.eq.s32.totalorder %s17, 0
    %p117 = por %p115, %p116
    %s118 = ssub.s32 %s11, %s18
    %p119 = scmp.eq.s32.totalorder %s118, 0
    %s121 = sadd.s32 %s120, 1
    %s122 = scalar_select %p119, %s120, %s121
    %p125 = pneg %p119
    %p126 = scmp.eq.s32.totalorder %s11, 1
    %p127 = por %p125, %p126
    %p128 = scmp.ne.s32.totalorder %s120, %s123
    %p129 = scmp.eq.s32.totalorder %s11, 0
    %p130 = por %p128, %p129
    %p131 = scmp.ne.s32.totalorder %s120, %s123
    %p132 = scmp.eq.s32.totalorder %s16, 1
    %p133 = por %p131, %p132
    %p134 = scmp.ne.s32.totalorder %s123, %s124
    %p135 = scmp.eq.s32.totalorder %s16, 0
    %p136 = por %p134, %p135
    %p137 = scmp.ne.s32.totalorder %s123, %s124
    %p138 = scmp.eq.s32.totalorder %s17, 1
    %p139 = por %p137, %p138
    %p141 = scmp.ne.s32.totalorder %s124, %s140
    %p142 = scmp.eq.s32.totalorder %s17, 0
    %p143 = por %p141, %p142
    %p144 = scmp.le.s32.totalorder 1, %s11
    %p145 = scmp.lt.s32.totalorder %s11, 3
    %p146 = pnand %p144, %p145
    %p147 = pneg %p146
    // Predicated region
    $region9: #{conv_bn_relu.2} parent=5 // pred_check
      _
    $region10: #{conv_bn_relu.2} parent=5 // pred_check_branch
      %149 = sbr.rel (%p146) target = $region12
    $region11: #{conv_bn_relu.2} parent=5 // pred_region
      %s150 = ssub.s32 %s11, 1
      // Predicated region
      $region13: #{conv_bn_relu.2} parent=11 // pred_check
        %p151 = pneg %p58
      $region14: #{conv_bn_relu.2} parent=11 // pred_check_branch
        %153 = sbr.rel (%p151) target = $region16
      $region15: #{conv_bn_relu.2} parent=11 // pred_region
        _
      $region16: #{conv_bn_relu.2} parent=11 // pred_fallthru
        _
    $region12: #{conv_bn_relu.2} parent=5 // pred_fallthru
      _
    %p154 = scmp.lt.s32.totalorder %s11, 2
    // Predicated region
    $region17: #{conv_bn_relu.2} parent=5 // pred_check
      %p155 = pneg %p154
    $region18: #{conv_bn_relu.2} parent=5 // pred_check_branch
      %157 = sbr.rel (%p155) target = $region20
    $region19: #{conv_bn_relu.2} parent=5 // pred_region
      // Predicated region
      $region21: #{conv_bn_relu.2} parent=19 // pred_check
        %p158 = pneg %p31
      $region22: #{conv_bn_relu.2} parent=19 // pred_check_branch
        %160 = sbr.rel (%p158) target = $region24
      $region23: #{conv_bn_relu.2} parent=19 // pred_region
        %p161 = scmp.lt.s32.totalorder %s11, 1
        %s162 = scalar_select %p161, %s11, 1
        %s163 = smul.addr %s162, 54
        %s164 = smul.addr %s163, 4
        %s165 = scalar_lea.vmem %s0, %s164
      $region24: #{conv_bn_relu.2} parent=19 // pred_fallthru
        _
    $region20: #{conv_bn_relu.2} parent=5 // pred_fallthru
      _
    %p166 = scmp.le.s32.totalorder 1, %s11
    %p167 = scmp.lt.s32.totalorder %s11, 3
    %p168 = pnand %p166, %p167
    %p169 = pneg %p168
    // Predicated region
    $region25: #{conv_bn_relu.2} parent=5 // pred_check
      _
    $region26: #{conv_bn_relu.2} parent=5 // pred_check_branch
      %171 = sbr.rel (%p168) target = $region28
    $region27: #{conv_bn_relu.2} parent=5 // pred_region
      %s172 = ssub.s32 %s11, 1
      %p173 = scmp.lt.s32.totalorder %s16, 1
      %s174 = scalar_select %p173, %s16, 1
      %s175 = smul.addr %s174, 54
      %s176 = smul.addr %s175, 4
      %s177 = scalar_lea.vmem %s0, %s176
      %p178 = pneg %p37
      %p179 = pneg %p34
      %p180 = pneg %p58
      %p181 = pneg %p55
      %p182 = pneg %p84
      %p183 = pneg %p81
      %p184 = scmp.lt.s32.totalorder %s16, 1
      %s185 = scalar_select %p184, %s16, 1
      %s186 = smul.addr %s185, 32
      %s187 = smul.addr %s186, 4
      %s188 = scalar_lea.vmem %s2, %s187
      %p189 = pneg %p110
      %p190 = pneg %p107
      %p191 = scmp.lt.s32.totalorder %s16, 1
      %s192 = scalar_select %p191, %s16, 1
      %s193 = scalar_lea.vmem %s3, %s192
      %p194 = pneg %p136
      %p195 = pneg %p133
      %p196 = scmp.lt.s32.totalorder %s16, 1
      %s197 = scalar_select %p196, %s16, 1
      %s198 = scalar_lea.vmem %s4, %s197
      %p199 = scmp.lt.s32.totalorder %s16, 1
      %s200 = scalar_select %p199, %s16, 1
      %s201 = smul.addr %s200, 54
      %s202 = smul.addr %s201, 4
      %s203 = scalar_lea.vmem %s0, %s202
      %p204 = scmp.lt.s32.totalorder %s16, 1
      %s205 = scalar_select %p204, %s16, 1
      %s206 = smul.addr %s205, 32
      %s207 = smul.addr %s206, 4
      %s208 = scalar_lea.vmem %s2, %s207
      %p209 = scmp.lt.s32.totalorder %s16, 1
      %s210 = scalar_select %p209, %s16, 1
      %s211 = scalar_lea.vmem %s3, %s210
      %p212 = scmp.lt.s32.totalorder %s16, 1
      %s213 = scalar_select %p212, %s16, 1
      %s214 = scalar_lea.vmem %s4, %s213
      %v216 = vld [vmem:[%s203] sm:$0xf]
      %v217 = vld [vmem:[%s203 + $0x4] sm:$0xf]
      %v218 = vld [vmem:[%s203 + $0xc] sm:$0xf]
      %v219 = vld [vmem:[%s203 + $0x10] sm:$0xf]
      %v220 = vld [vmem:[%s203 + $0x18] sm:$0xf]
      %v221 = vld [vmem:[%s203 + $0x1c] sm:$0xf]
      %v222 = vld [vmem:[%s203 + $0x24] sm:$0xf]
      %v223 = vld [vmem:[%s203 + $0x28] sm:$0xf]
      %v224 = vld [vmem:[%s203 + $0x30] sm:$0xf]
      %v225 = vld [vmem:[%s203 + $0x34] sm:$0xf]
      %v226 = vld [vmem:[%s203 + $0x3c] sm:$0xf]
      %v227 = vld [vmem:[%s203 + $0x40] sm:$0xf]
      %v228 = vld [vmem:[%s203 + $0x48] sm:$0xf]
      %v229 = vld [vmem:[%s203 + $0x4c] sm:$0xf]
      %v230 = vld [vmem:[%s203 + $0x54] sm:$0xf]
      %v231 = vld [vmem:[%s203 + $0x58] sm:$0xf]
      %v232 = vld [vmem:[%s203 + $0x60] sm:$0xf]
      %v233 = vld [vmem:[%s203 + $0x64] sm:$0xf]
      %v234 = vld [vmem:[%s203 + $0x6c] sm:$0xf]
      %v235 = vld [vmem:[%s203 + $0x70] sm:$0xf]
      %v236 = vld [vmem:[%s203 + $0x78] sm:$0xf]
      %v237 = vld [vmem:[%s203 + $0x7c] sm:$0xf]
      %v238 = vld [vmem:[%s203 + $0x84] sm:$0xf]
      %v239 = vld [vmem:[%s203 + $0x88] sm:$0xf]
      %v240 = vld [vmem:[%s203 + $0x90] sm:$0xf]
      %v241 = vld [vmem:[%s203 + $0x94] sm:$0xf]
      %v242 = vld [vmem:[%s203 + $0x9c] sm:$0xf]
      %v243 = vld [vmem:[%s203 + $0xa0] sm:$0xf]
      %v244 = vld [vmem:[%s203 + $0xa8] sm:$0xf]
      %v245 = vld [vmem:[%s203 + $0xac] sm:$0xf]
      %v246 = vld [vmem:[%s203 + $0xb4] sm:$0xf]
      %v247 = vld [vmem:[%s203 + $0xb8] sm:$0xf]
      %v248 = vld [vmem:[%s203 + $0xc0] sm:$0xf]
      %v249 = vld [vmem:[%s203 + $0xc4] sm:$0xf]
      %v250 = vld [vmem:[%s203 + $0xcc] sm:$0xf]
      %v251 = vld [vmem:[%s203 + $0xd0] sm:$0xf]
      %v252 = vld [vmem:[%s203 + $0x8] sm:$0x1]
      %v253 = vld [vmem:[%s203 + $0x14] sm:$0x1]
      %v254 = vld [vmem:[%s203 + $0x20] sm:$0x1]
      %v255 = vld [vmem:[%s203 + $0x2c] sm:$0x1]
      %v256 = vld [vmem:[%s203 + $0x38] sm:$0x1]
      %v257 = vld [vmem:[%s203 + $0x44] sm:$0x1]
      %v258 = vld [vmem:[%s203 + $0x50] sm:$0x1]
      %v259 = vld [vmem:[%s203 + $0x5c] sm:$0x1]
      %v260 = vld [vmem:[%s203 + $0x68] sm:$0x1]
      %v261 = vld [vmem:[%s203 + $0x74] sm:$0x1]
      %v262 = vld [vmem:[%s203 + $0x80] sm:$0x1]
      %v263 = vld [vmem:[%s203 + $0x8c] sm:$0x1]
      %v264 = vld [vmem:[%s203 + $0x98] sm:$0x1]
      %v265 = vld [vmem:[%s203 + $0xa4] sm:$0x1]
      %v266 = vld [vmem:[%s203 + $0xb0] sm:$0x1]
      %v267 = vld [vmem:[%s203 + $0xbc] sm:$0x1]
      %v268 = vld [vmem:[%s203 + $0xc8] sm:$0x1]
      %v269 = vld [vmem:[%s203 + $0xd4] sm:$0x1]
      %v270 = vld [vmem:[%s203] sm:$0xe]
      %v271 = vld [vmem:[%s203 + $0xc] sm:$0xe]
      %v272 = vld [vmem:[%s203 + $0x18] sm:$0xe]
      %v273 = vld [vmem:[%s203 + $0x24] sm:$0xe]
      %v274 = vld [vmem:[%s203 + $0x30] sm:$0xe]
      %v275 = vld [vmem:[%s203 + $0x3c] sm:$0xe]
      %v276 = vld [vmem:[%s203 + $0x48] sm:$0xe]
      %v277 = vld [vmem:[%s203 + $0x54] sm:$0xe]
      %v278 = vld [vmem:[%s203 + $0x60] sm:$0xe]
      %v279 = vld [vmem:[%s203 + $0x6c] sm:$0xe]
      %v280 = vld [vmem:[%s203 + $0x78] sm:$0xe]
      %v281 = vld [vmem:[%s203 + $0x84] sm:$0xe]
      %v282 = vld [vmem:[%s203 + $0x90] sm:$0xe]
      %v283 = vld [vmem:[%s203 + $0x9c] sm:$0xe]
      %v284 = vld [vmem:[%s203 + $0xa8] sm:$0xe]
      %v285 = vld [vmem:[%s203 + $0xb4] sm:$0xe]
      %v286 = vld [vmem:[%s203 + $0xc0] sm:$0xe]
      %v287 = vld [vmem:[%s203 + $0xcc] sm:$0xe]
      %v324 = vunpack.c.l.b16 %v216
      %v325 = vunpack.c.l.b16 %v217
      %v326 = vunpack.c.l.b16 %v218
      %v327 = vunpack.c.l.b16 %v219
      %v328 = vunpack.c.l.b16 %v220
      %v329 = vunpack.c.l.b16 %v221
      %v330 = vunpack.c.l.b16 %v222
      %v331 = vunpack.c.l.b16 %v223
      %v332 = vunpack.c.l.b16 %v224
      %v333 = vunpack.c.l.b16 %v225
      %v334 = vunpack.c.l.b16 %v226
      %v335 = vunpack.c.l.b16 %v227
      %v336 = vunpack.c.l.b16 %v228
      %v337 = vunpack.c.l.b16 %v229
      %v338 = vunpack.c.l.b16 %v230
      %v339 = vunpack.c.l.b16 %v231
      %v340 = vunpack.c.l.b16 %v232
      %v341 = vunpack.c.l.b16 %v233
      %v342 = vunpack.c.l.b16 %v234
      %v343 = vunpack.c.l.b16 %v235
      %v344 = vunpack.c.l.b16 %v236
      %v345 = vunpack.c.l.b16 %v237
      %v346 = vunpack.c.l.b16 %v238
      %v347 = vunpack.c.l.b16 %v239
      %v348 = vunpack.c.l.b16 %v240
      %v349 = vunpack.c.l.b16 %v241
      %v350 = vunpack.c.l.b16 %v242
      %v351 = vunpack.c.l.b16 %v243
      %v352 = vunpack.c.l.b16 %v244
      %v353 = vunpack.c.l.b16 %v245
      %v354 = vunpack.c.l.b16 %v246
      %v355 = vunpack.c.l.b16 %v247
      %v356 = vunpack.c.l.b16 %v248
      %v357 = vunpack.c.l.b16 %v249
      %v358 = vunpack.c.l.b16 %v250
      %v359 = vunpack.c.l.b16 %v251
      %v360 = vpack.c.b16 %v325, %v324
      %v361 = vpack.c.b16 %v327, %v326
      %v362 = vpack.c.b16 %v329, %v328
      %v363 = vpack.c.b16 %v331, %v330
      %v364 = vpack.c.b16 %v333, %v332
      %v365 = vpack.c.b16 %v335, %v334
      %v366 = vpack.c.b16 %v337, %v336
      %v367 = vpack.c.b16 %v339, %v338
      %v368 = vpack.c.b16 %v341, %v340
      %v369 = vpack.c.b16 %v343, %v342
      %v370 = vpack.c.b16 %v345, %v344
      %v371 = vpack.c.b16 %v347, %v346
      %v372 = vpack.c.b16 %v349, %v348
      %v373 = vpack.c.b16 %v351, %v350
      %v374 = vpack.c.b16 %v353, %v352
      %v375 = vpack.c.b16 %v355, %v354
      %v376 = vpack.c.b16 %v357, %v356
      %v377 = vpack.c.b16 %v359, %v358
      %v396 = vunpack.c.l.b16 %v252
      %v397 = vunpack.c.l.b16 %v253
      %v398 = vunpack.c.l.b16 %v254
      %v399 = vunpack.c.l.b16 %v255
      %v400 = vunpack.c.l.b16 %v256
      %v401 = vunpack.c.l.b16 %v257
      %v402 = vunpack.c.l.b16 %v258
      %v403 = vunpack.c.l.b16 %v259
      %v404 = vunpack.c.l.b16 %v260
      %v405 = vunpack.c.l.b16 %v261
      %v406 = vunpack.c.l.b16 %v262
      %v407 = vunpack.c.l.b16 %v263
      %v408 = vunpack.c.l.b16 %v264
      %v409 = vunpack.c.l.b16 %v265
      %v410 = vunpack.c.l.b16 %v266
      %v411 = vunpack.c.l.b16 %v267
      %v412 = vunpack.c.l.b16 %v268
      %v413 = vunpack.c.l.b16 %v269
      %v414 = vpack.c.b16 %v396, %v396
      %v415 = vpack.c.b16 %v397, %v397
      %v416 = vpack.c.b16 %v398, %v398
      %v417 = vpack.c.b16 %v399, %v399
      %v418 = vpack.c.b16 %v400, %v400
      %v419 = vpack.c.b16 %v401, %v401
      %v420 = vpack.c.b16 %v402, %v402
      %v421 = vpack.c.b16 %v403, %v403
      %v422 = vpack.c.b16 %v404, %v404
      %v423 = vpack.c.b16 %v405, %v405
      %v424 = vpack.c.b16 %v406, %v406
      %v425 = vpack.c.b16 %v407, %v407
      %v426 = vpack.c.b16 %v408, %v408
      %v427 = vpack.c.b16 %v409, %v409
      %v428 = vpack.c.b16 %v410, %v410
      %v429 = vpack.c.b16 %v411, %v411
      %v430 = vpack.c.b16 %v412, %v412
      %v431 = vpack.c.b16 %v413, %v413
      %vm432 = vsmask.f32 7424
      %v434 = vshrl.u32 %v360, 16
      %v436 = vshll.u32 %v360, 16
      %v438 = vrot.slane %v436, 1
      %v439 = vor.u32 %v434, %v438
      %v441 = vshll.u32 %v414, 16
      %v443 = vrot.slane %v441, 1
      %v444 = vsel %vm432, %v439, %v443
      %v446 = vshrl.u32 %v361, 16
      %v448 = vshll.u32 %v361, 16
      %v450 = vrot.slane %v448, 1
      %v451 = vor.u32 %v446, %v450
      %v453 = vshll.u32 %v415, 16
      %v455 = vrot.slane %v453, 1
      %v456 = vsel %vm432, %v451, %v455
      %v458 = vshrl.u32 %v362, 16
      %v460 = vshll.u32 %v362, 16
      %v462 = vrot.slane %v460, 1
      %v463 = vor.u32 %v458, %v462
      %v465 = vshll.u32 %v416, 16
      %v467 = vrot.slane %v465, 1
      %v468 = vsel %vm432, %v463, %v467
      %v470 = vshrl.u32 %v363, 16
      %v472 = vshll.u32 %v363, 16
      %v474 = vrot.slane %v472, 1
      %v475 = vor.u32 %v470, %v474
      %v477 = vshll.u32 %v417, 16
      %v479 = vrot.slane %v477, 1
      %v480 = vsel %vm432, %v475, %v479
      %v482 = vshrl.u32 %v364, 16
      %v484 = vshll.u32 %v364, 16
      %v486 = vrot.slane %v484, 1
      %v487 = vor.u32 %v482, %v486
      %v489 = vshll.u32 %v418, 16
      %v491 = vrot.slane %v489, 1
      %v492 = vsel %vm432, %v487, %v491
      %v494 = vshrl.u32 %v365, 16
      %v496 = vshll.u32 %v365, 16
      %v498 = vrot.slane %v496, 1
      %v499 = vor.u32 %v494, %v498
      %v501 = vshll.u32 %v419, 16
      %v503 = vrot.slane %v501, 1
      %v504 = vsel %vm432, %v499, %v503
      %v506 = vshrl.u32 %v366, 16
      %v508 = vshll.u32 %v366, 16
      %v510 = vrot.slane %v508, 1
      %v511 = vor.u32 %v506, %v510
      %v513 = vshll.u32 %v420, 16
      %v515 = vrot.slane %v513, 1
      %v516 = vsel %vm432, %v511, %v515
      %v518 = vshrl.u32 %v367, 16
      %v520 = vshll.u32 %v367, 16
      %v522 = vrot.slane %v520, 1
      %v523 = vor.u32 %v518, %v522
      %v525 = vshll.u32 %v421, 16
      %v527 = vrot.slane %v525, 1
      %v528 = vsel %vm432, %v523, %v527
      %v530 = vshrl.u32 %v368, 16
      %v532 = vshll.u32 %v368, 16
      %v534 = vrot.slane %v532, 1
      %v535 = vor.u32 %v530, %v534
      %v537 = vshll.u32 %v422, 16
      %v539 = vrot.slane %v537, 1
      %v540 = vsel %vm432, %v535, %v539
      %v542 = vshrl.u32 %v369, 16
      %v544 = vshll.u32 %v369, 16
      %v546 = vrot.slane %v544, 1
      %v547 = vor.u32 %v542, %v546
      %v549 = vshll.u32 %v423, 16
      %v551 = vrot.slane %v549, 1
      %v552 = vsel %vm432, %v547, %v551
      %v554 = vshrl.u32 %v370, 16
      %v556 = vshll.u32 %v370, 16
      %v558 = vrot.slane %v556, 1
      %v559 = vor.u32 %v554, %v558
      %v561 = vshll.u32 %v424, 16
      %v563 = vrot.slane %v561, 1
      %v564 = vsel %vm432, %v559, %v563
      %v566 = vshrl.u32 %v371, 16
      %v568 = vshll.u32 %v371, 16
      %v570 = vrot.slane %v568, 1
      %v571 = vor.u32 %v566, %v570
      %v573 = vshll.u32 %v425, 16
      %v575 = vrot.slane %v573, 1
      %v576 = vsel %vm432, %v571, %v575
      %v578 = vshrl.u32 %v372, 16
      %v580 = vshll.u32 %v372, 16
      %v582 = vrot.slane %v580, 1
      %v583 = vor.u32 %v578, %v582
      %v585 = vshll.u32 %v426, 16
      %v587 = vrot.slane %v585, 1
      %v588 = vsel %vm432, %v583, %v587
      %v590 = vshrl.u32 %v373, 16
      %v592 = vshll.u32 %v373, 16
      %v594 = vrot.slane %v592, 1
      %v595 = vor.u32 %v590, %v594
      %v597 = vshll.u32 %v427, 16
      %v599 = vrot.slane %v597, 1
      %v600 = vsel %vm432, %v595, %v599
      %v602 = vshrl.u32 %v374, 16
      %v604 = vshll.u32 %v374, 16
      %v606 = vrot.slane %v604, 1
      %v607 = vor.u32 %v602, %v606
      %v609 = vshll.u32 %v428, 16
      %v611 = vrot.slane %v609, 1
      %v612 = vsel %vm432, %v607, %v611
      %v614 = vshrl.u32 %v375, 16
      %v616 = vshll.u32 %v375, 16
      %v618 = vrot.slane %v616, 1
      %v619 = vor.u32 %v614, %v618
      %v621 = vshll.u32 %v429, 16
      %v623 = vrot.slane %v621, 1
      %v624 = vsel %vm432, %v619, %v623
      %v626 = vshrl.u32 %v376, 16
      %v628 = vshll.u32 %v376, 16
      %v630 = vrot.slane %v628, 1
      %v631 = vor.u32 %v626, %v630
      %v633 = vshll.u32 %v430, 16
      %v635 = vrot.slane %v633, 1
      %v636 = vsel %vm432, %v631, %v635
      %v638 = vshrl.u32 %v377, 16
      %v640 = vshll.u32 %v377, 16
      %v642 = vrot.slane %v640, 1
      %v643 = vor.u32 %v638, %v642
      %v645 = vshll.u32 %v431, 16
      %v647 = vrot.slane %v645, 1
      %v648 = vsel %vm432, %v643, %v647
      %649 = vrot.lane.b32.xlu0 %v444, 4
      %v650 = vpop.permute.xlu0 %649
      %651 = vrot.lane.b32.xlu0 %v456, 4
      %v652 = vpop.permute.xlu0 %651
      %653 = vrot.lane.b32.xlu0 %v468, 4
      %v654 = vpop.permute.xlu0 %653
      %655 = vrot.lane.b32.xlu0 %v480, 4
      %v656 = vpop.permute.xlu0 %655
      %657 = vrot.lane.b32.xlu0 %v492, 4
      %v658 = vpop.permute.xlu0 %657
      %659 = vrot.lane.b32.xlu0 %v504, 4
      %v660 = vpop.permute.xlu0 %659
      %661 = vrot.lane.b32.xlu0 %v516, 4
      %v662 = vpop.permute.xlu0 %661
      %663 = vrot.lane.b32.xlu0 %v528, 4
      %v664 = vpop.permute.xlu0 %663
      %665 = vrot.lane.b32.xlu0 %v540, 4
      %v666 = vpop.permute.xlu0 %665
      %667 = vrot.lane.b32.xlu0 %v552, 4
      %v668 = vpop.permute.xlu0 %667
      %669 = vrot.lane.b32.xlu0 %v564, 4
      %v670 = vpop.permute.xlu0 %669
      %671 = vrot.lane.b32.xlu0 %v576, 4
      %v672 = vpop.permute.xlu0 %671
      %673 = vrot.lane.b32.xlu0 %v588, 4
      %v674 = vpop.permute.xlu0 %673
      %675 = vrot.lane.b32.xlu0 %v600, 4
      %v676 = vpop.permute.xlu0 %675
      %677 = vrot.lane.b32.xlu0 %v612, 4
      %v678 = vpop.permute.xlu0 %677
      %679 = vrot.lane.b32.xlu0 %v624, 4
      %v680 = vpop.permute.xlu0 %679
      %681 = vrot.lane.b32.xlu0 %v636, 4
      %v682 = vpop.permute.xlu0 %681
      %683 = vrot.lane.b32.xlu0 %v648, 4
      %v684 = vpop.permute.xlu0 %683
      %v703 = vunpack.c.l.b16 %v270
      %v704 = vunpack.c.l.b16 %v271
      %v705 = vunpack.c.l.b16 %v272
      %v706 = vunpack.c.l.b16 %v273
      %v707 = vunpack.c.l.b16 %v274
      %v708 = vunpack.c.l.b16 %v275
      %v709 = vunpack.c.l.b16 %v276
      %v710 = vunpack.c.l.b16 %v277
      %v711 = vunpack.c.l.b16 %v278
      %v712 = vunpack.c.l.b16 %v279
      %v713 = vunpack.c.l.b16 %v280
      %v714 = vunpack.c.l.b16 %v281
      %v715 = vunpack.c.l.b16 %v282
      %v716 = vunpack.c.l.b16 %v283
      %v717 = vunpack.c.l.b16 %v284
      %v718 = vunpack.c.l.b16 %v285
      %v719 = vunpack.c.l.b16 %v286
      %v720 = vunpack.c.l.b16 %v287
      %v721 = vpack.c.b16 %v325, %v703
      %v722 = vpack.c.b16 %v327, %v704
      %v723 = vpack.c.b16 %v329, %v705
      %v724 = vpack.c.b16 %v331, %v706
      %v725 = vpack.c.b16 %v333, %v707
      %v726 = vpack.c.b16 %v335, %v708
      %v727 = vpack.c.b16 %v337, %v709
      %v728 = vpack.c.b16 %v339, %v710
      %v729 = vpack.c.b16 %v341, %v711
      %v730 = vpack.c.b16 %v343, %v712
      %v731 = vpack.c.b16 %v345, %v713
      %v732 = vpack.c.b16 %v347, %v714
      %v733 = vpack.c.b16 %v349, %v715
      %v734 = vpack.c.b16 %v351, %v716
      %v735 = vpack.c.b16 %v353, %v717
      %v736 = vpack.c.b16 %v355, %v718
      %v737 = vpack.c.b16 %v357, %v719
      %v738 = vpack.c.b16 %v359, %v720
      %vm739 = vcmask 1046528
      %v740 = vrot.slane %v721, 1
      %v741 = vrot.slane %v414, 1
      %v742 = vsel %vm739, %v740, %v741
      %v743 = vrot.slane %v722, 1
      %v744 = vrot.slane %v415, 1
      %v745 = vsel %vm739, %v743, %v744
      %v746 = vrot.slane %v723, 1
      %v747 = vrot.slane %v416, 1
      %v748 = vsel %vm739, %v746, %v747
      %v749 = vrot.slane %v724, 1
      %v750 = vrot.slane %v417, 1
      %v751 = vsel %vm739, %v749, %v750
      %v752 = vrot.slane %v725, 1
      %v753 = vrot.slane %v418, 1
      %v754 = vsel %vm739, %v752, %v753
      %v755 = vrot.slane %v726, 1
      %v756 = vrot.slane %v419, 1
      %v757 = vsel %vm739, %v755, %v756
      %v758 = vrot.slane %v727, 1
      %v759 = vrot.slane %v420, 1
      %v760 = vsel %vm739, %v758, %v759
      %v761 = vrot.slane %v728, 1
      %v762 = vrot.slane %v421, 1
      %v763 = vsel %vm739, %v761, %v762
      %v764 = vrot.slane %v729, 1
      %v765 = vrot.slane %v422, 1
      %v766 = vsel %vm739, %v764, %v765
      %v767 = vrot.slane %v730, 1
      %v768 = vrot.slane %v423, 1
      %v769 = vsel %vm739, %v767, %v768
      %v770 = vrot.slane %v731, 1
      %v771 = vrot.slane %v424, 1
      %v772 = vsel %vm739, %v770, %v771
      %v773 = vrot.slane %v732, 1
      %v774 = vrot.slane %v425, 1
      %v775 = vsel %vm739, %v773, %v774
      %v776 = vrot.slane %v733, 1
      %v777 = vrot.slane %v426, 1
      %v778 = vsel %vm739, %v776, %v777
      %v779 = vrot.slane %v734, 1
      %v780 = vrot.slane %v427, 1
      %v781 = vsel %vm739, %v779, %v780
      %v782 = vrot.slane %v735, 1
      %v783 = vrot.slane %v428, 1
      %v784 = vsel %vm739, %v782, %v783
      %v785 = vrot.slane %v736, 1
      %v786 = vrot.slane %v429, 1
      %v787 = vsel %vm739, %v785, %v786
      %v788 = vrot.slane %v737, 1
      %v789 = vrot.slane %v430, 1
      %v790 = vsel %vm739, %v788, %v789
      %v791 = vrot.slane %v738, 1
      %v792 = vrot.slane %v431, 1
      %v793 = vsel %vm739, %v791, %v792
      %794 = vrot.lane.b32.xlu0 %v742, 8
      %v795 = vpop.permute.xlu0 %794
      %796 = vrot.lane.b32.xlu0 %v745, 8
      %v797 = vpop.permute.xlu0 %796
      %798 = vrot.lane.b32.xlu0 %v748, 8
      %v799 = vpop.permute.xlu0 %798
      %800 = vrot.lane.b32.xlu0 %v751, 8
      %v801 = vpop.permute.xlu0 %800
      %802 = vrot.lane.b32.xlu0 %v754, 8
      %v803 = vpop.permute.xlu0 %802
      %804 = vrot.lane.b32.xlu0 %v757, 8
      %v805 = vpop.permute.xlu0 %804
      %806 = vrot.lane.b32.xlu0 %v760, 8
      %v807 = vpop.permute.xlu0 %806
      %808 = vrot.lane.b32.xlu0 %v763, 8
      %v809 = vpop.permute.xlu0 %808
      %810 = vrot.lane.b32.xlu0 %v766, 8
      %v811 = vpop.permute.xlu0 %810
      %812 = vrot.lane.b32.xlu0 %v769, 8
      %v813 = vpop.permute.xlu0 %812
      %814 = vrot.lane.b32.xlu0 %v772, 8
      %v815 = vpop.permute.xlu0 %814
      %816 = vrot.lane.b32.xlu0 %v775, 8
      %v817 = vpop.permute.xlu0 %816
      %818 = vrot.lane.b32.xlu0 %v778, 8
      %v819 = vpop.permute.xlu0 %818
      %820 = vrot.lane.b32.xlu0 %v781, 8
      %v821 = vpop.permute.xlu0 %820
      %822 = vrot.lane.b32.xlu0 %v784, 8
      %v823 = vpop.permute.xlu0 %822
      %824 = vrot.lane.b32.xlu0 %v787, 8
      %v825 = vpop.permute.xlu0 %824
      %826 = vrot.lane.b32.xlu0 %v790, 8
      %v827 = vpop.permute.xlu0 %826
      %828 = vrot.lane.b32.xlu0 %v793, 8
      %v829 = vpop.permute.xlu0 %828
      %vm830 = vcmask 31744
      %v832 = vsel %vm830, %v360, %v650
      %v834 = vsel %vm830, %v361, %v652
      %v836 = vsel %vm830, %v362, %v654
      %v838 = vsel %vm830, %v363, %v656
      %v840 = vsel %vm830, %v364, %v658
      %v842 = vsel %vm830, %v365, %v660
      %v844 = vsel %vm830, %v366, %v662
      %v846 = vsel %vm830, %v367, %v664
      %v848 = vsel %vm830, %v368, %v666
      %v850 = vsel %vm830, %v369, %v668
      %v852 = vsel %vm830, %v370, %v670
      %v854 = vsel %vm830, %v371, %v672
      %v856 = vsel %vm830, %v372, %v674
      %v858 = vsel %vm830, %v373, %v676
      %v860 = vsel %vm830, %v374, %v678
      %v862 = vsel %vm830, %v375, %v680
      %v864 = vsel %vm830, %v376, %v682
      %v866 = vsel %vm830, %v377, %v684
      %vm867 = vcmask 64512
      %v869 = vsel %vm867, %v832, %v795
      %v871 = vsel %vm867, %v834, %v797
      %v873 = vsel %vm867, %v836, %v799
      %v875 = vsel %vm867, %v838, %v801
      %v877 = vsel %vm867, %v840, %v803
      %v879 = vsel %vm867, %v842, %v805
      %v881 = vsel %vm867, %v844, %v807
      %v883 = vsel %vm867, %v846, %v809
      %v885 = vsel %vm867, %v848, %v811
      %v887 = vsel %vm867, %v850, %v813
      %v889 = vsel %vm867, %v852, %v815
      %v891 = vsel %vm867, %v854, %v817
      %v893 = vsel %vm867, %v856, %v819
      %v895 = vsel %vm867, %v858, %v821
      %v897 = vsel %vm867, %v860, %v823
      %v899 = vsel %vm867, %v862, %v825
      %v901 = vsel %vm867, %v864, %v827
      %v903 = vsel %vm867, %v866, %v829
      %v904 = vld [vmem:[%s1] sm:$0xf]
      %v905 = vld [vmem:[%s1 + $0x4] sm:$0x3]
      %v908 = vunpack.c.l.b16 %v904
      %v909 = vunpack.c.l.b16 %v905
      %v910 = vpack.c.b16 %v909, %v908
      %vm911 = vcmask 97280
      %v912 = vsel %vm911, %v869, 0
      %v914 = vsel %vm911, %v871, 0
      %v916 = vsel %vm911, %v873, 0
      %v918 = vsel %vm911, %v875, 0
      %v920 = vsel %vm911, %v877, 0
      %v922 = vsel %vm911, %v879, 0
      %v924 = vsel %vm911, %v881, 0
      %v926 = vsel %vm911, %v883, 0
      %v928 = vsel %vm911, %v885, 0
      %v930 = vsel %vm911, %v887, 0
      %v932 = vsel %vm911, %v889, 0
      %v934 = vsel %vm911, %v891, 0
      %v936 = vsel %vm911, %v893, 0
      %v938 = vsel %vm911, %v895, 0
      %v940 = vsel %vm911, %v897, 0
      %v942 = vsel %vm911, %v899, 0
      %vm944 = vcmask 1045504
      %v946 = vsel %vm944, %v910, 0
      %948 = vmatprep.subr.bf16.mxu0 0
      %949 = vmatpush1.bf16.msra.mxu0 %v946
      %950 = vmatprep.subr.bf16.mxu0 0
      %951 = vmatpush1.bf16.msra.mxu0 0
      %952 = vmatprep.subr.bf16.mxu0 0
      %953 = vmatpush1.bf16.msra.mxu0 0
      %954 = vmatprep.subr.bf16.mxu0 0
      %955 = vmatpush1.bf16.msra.mxu0 0
      %956 = vmatprep.subr.bf16.mxu0 0
      %957 = vmatpush1.bf16.msra.mxu0 0
      %958 = vmatprep.subr.bf16.mxu0 0
      %959 = vmatpush1.bf16.msra.mxu0 0
      %960 = vmatprep.subr.bf16.mxu0 0
      %961 = vmatpush1.bf16.msra.mxu0 0
      %962 = vmatprep.subr.bf16.mxu0 0
      %963 = vmatpush1.bf16.msra.mxu0 0
      %964 = vmatprep.subr.bf16.mxu0 0
      %965 = vmatpush1.bf16.msra.mxu0 0
      %966 = vmatprep.subr.bf16.mxu0 0
      %967 = vmatpush1.bf16.msra.mxu0 0
      %968 = vmatprep.subr.bf16.mxu0 0
      %969 = vmatpush1.bf16.msra.mxu0 0
      %970 = vmatprep.subr.bf16.mxu0 0
      %971 = vmatpush1.bf16.msra.mxu0 0
      %972 = vmatprep.subr.bf16.mxu0 0
      %973 = vmatpush1.bf16.msra.mxu0 0
      %974 = vmatprep.subr.bf16.mxu0 0
      %975 = vmatpush1.bf16.msra.mxu0 0
      %976 = vmatprep.subr.bf16.mxu0 0
      %977 = vmatpush1.bf16.msra.mxu0 0
      %978 = vmatprep.subr.bf16.mxu0 0
      %979 = vmatpush1.bf16.msra.mxu0 0
      %980 = vmatprep.mubr.bf16.mxu0 0
      %981 = vmatmul.mubr.bf16.gmra.mrb[0].mxu0 %v912
      %v982 = vpop.f32.mrb[0].mxu0
      %v983 = vadd.f32 0.0, %v982
      %v984 = vpop.f32.mrb[0].mxu0
      %v985 = vpop.f32.mrb[0].mxu0
      %v986 = vadd.f32 0.0, %v985
      %v987 = vpop.f32.mrb[0].mxu0
      %988 = vmatprep.mubr.bf16.mxu0 0
      %989 = vmatmul.mubr.bf16.gmra.mrb[0].mxu0 %v914
      %v990 = vpop.f32.mrb[0].mxu0
      %v991 = vadd.f32 0.0, %v990
      %v992 = vpop.f32.mrb[0].mxu0
      %v993 = vpop.f32.mrb[0].mxu0
      %v994 = vadd.f32 0.0, %v993
      %v995 = vpop.f32.mrb[0].mxu0
      %996 = vmatprep.mubr.bf16.mxu0 0
      %997 = vmatmul.mubr.bf16.gmra.mrb[0].mxu0 %v916
      %v998 = vpop.f32.mrb[0].mxu0
      %v999 = vadd.f32 0.0, %v998
      %v1000 = vpop.f32.mrb[0].mxu0
      %v1001 = vpop.f32.mrb[0].mxu0
      %v1002 = vadd.f32 0.0, %v1001
      %v1003 = vpop.f32.mrb[0].mxu0
      %1004 = vmatprep.mubr.bf16.mxu0 0
      %1005 = vmatmul.mubr.bf16.gmra.mrb[0].mxu0 %v918
      %v1006 = vpop.f32.mrb[0].mxu0
      %v1007 = vadd.f32 0.0, %v1006
      %v1008 = vpop.f32.mrb[0].mxu0
      %v1009 = vpop.f32.mrb[0].mxu0
      %v1010 = vadd.f32 0.0, %v1009
      %v1011 = vpop.f32.mrb[0].mxu0
      %1012 = vmatprep.mubr.bf16.mxu0 0
      %1013 = vmatmul.mubr.bf16.gmra.mrb[0].mxu0 %v920
      %v1014 = vpop.f32.mrb[0].mxu0
      %v1015 = vadd.f32 0.0, %v1014
      %v1016 = vpop.f32.mrb[0].mxu0
      %v1017 = vpop.f32.mrb[0].mxu0
      %v1018 = vadd.f32 0.0, %v1017
      %v1019 = vpop.f32.mrb[0].mxu0
      %1020 = vmatprep.mubr.bf16.mxu0 0
      %1021 = vmatmul.mubr.bf16.gmra.mrb[0].mxu0 %v922
      %v1022 = vpop.f32.mrb[0].mxu0
      %v1023 = vadd.f32 0.0, %v1022
      %v1024 = vpop.f32.mrb[0].mxu0
      %v1025 = vpop.f32.mrb[0].mxu0
      %v1026 = vadd.f32 0.0, %v1025
      %v1027 = vpop.f32.mrb[0].mxu0
      %1028 = vmatprep.mubr.bf16.mxu0 0
      %1029 = vmatmul.mubr.bf16.gmra.mrb[0].mxu0 %v924
      %v1030 = vpop.f32.mrb[0].mxu0
      %v1031 = vadd.f32 0.0, %v1030
      %v1032 = vpop.f32.mrb[0].mxu0
      %v1033 = vpop.f32.mrb[0].mxu0
      %v1034 = vadd.f32 0.0, %v1033
      %v1035 = vpop.f32.mrb[0].mxu0
      %1036 = vmatprep.mubr.bf16.mxu0 0
      %1037 = vmatmul.mubr.bf16.gmra.mrb[0].mxu0 %v926
      %v1038 = vpop.f32.mrb[0].mxu0
      %v1039 = vadd.f32 0.0, %v1038
      %v1040 = vpop.f32.mrb[0].mxu0
      %v1041 = vpop.f32.mrb[0].mxu0
      %v1042 = vadd.f32 0.0, %v1041
      %v1043 = vpop.f32.mrb[0].mxu0
      %1044 = vmatprep.mubr.bf16.mxu0 0
      %1045 = vmatmul.mubr.bf16.gmra.mrb[0].mxu0 %v928
      %v1046 = vpop.f32.mrb[0].mxu0
      %v1047 = vadd.f32 0.0, %v1046
      %v1048 = vpop.f32.mrb[0].mxu0
      %v1049 = vpop.f32.mrb[0].mxu0
      %v1050 = vadd.f32 0.0, %v1049
      %v1051 = vpop.f32.mrb[0].mxu0
      %1052 = vmatprep.mubr.bf16.mxu0 0
      %1053 = vmatmul.mubr.bf16.gmra.mrb[0].mxu0 %v930
      %v1054 = vpop.f32.mrb[0].mxu0
      %v1055 = vadd.f32 0.0, %v1054
      %v1056 = vpop.f32.mrb[0].mxu0
      %v1057 = vpop.f32.mrb[0].mxu0
      %v1058 = vadd.f32 0.0, %v1057
      %v1059 = vpop.f32.mrb[0].mxu0
      %1060 = vmatprep.mubr.bf16.mxu0 0
      %1061 = vmatmul.mubr.bf16.gmra.mrb[0].mxu0 %v932
      %v1062 = vpop.f32.mrb[0].mxu0
      %v1063 = vadd.f32 0.0, %v1062
      %v1064 = vpop.f32.mrb[0].mxu0
      %v1065 = vpop.f32.mrb[0].mxu0
      %v1066 = vadd.f32 0.0, %v1065
      %v1067 = vpop.f32.mrb[0].mxu0
      %1068 = vmatprep.mubr.bf16.mxu0 0
      %1069 = vmatmul.mubr.bf16.gmra.mrb[0].mxu0 %v934
      %v1070 = vpop.f32.mrb[0].mxu0
      %v1071 = vadd.f32 0.0, %v1070
      %v1072 = vpop.f32.mrb[0].mxu0
      %v1073 = vpop.f32.mrb[0].mxu0
      %v1074 = vadd.f32 0.0, %v1073
      %v1075 = vpop.f32.mrb[0].mxu0
      %1076 = vmatprep.mubr.bf16.mxu0 0
      %1077 = vmatmul.mubr.bf16.gmra.mrb[0].mxu0 %v936
      %v1078 = vpop.f32.mrb[0].mxu0
      %v1079 = vadd.f32 0.0, %v1078
      %v1080 = vpop.f32.mrb[0].mxu0
      %v1081 = vpop.f32.mrb[0].mxu0
      %v1082 = vadd.f32 0.0, %v1081
      %v1083 = vpop.f32.mrb[0].mxu0
      %1084 = vmatprep.mubr.bf16.mxu0 0
      %1085 = vmatmul.mubr.bf16.gmra.mrb[0].mxu0 %v938
      %v1086 = vpop.f32.mrb[0].mxu0
      %v1087 = vadd.f32 0.0, %v1086
      %v1088 = vpop.f32.mrb[0].mxu0
      %v1089 = vpop.f32.mrb[0].mxu0
      %v1090 = vadd.f32 0.0, %v1089
      %v1091 = vpop.f32.mrb[0].mxu0
      %1092 = vmatprep.mubr.bf16.mxu0 0
      %1093 = vmatmul.mubr.bf16.gmra.mrb[0].mxu0 %v940
      %v1094 = vpop.f32.mrb[0].mxu0
      %v1095 = vadd.f32 0.0, %v1094
      %v1096 = vpop.f32.mrb[0].mxu0
      %v1097 = vpop.f32.mrb[0].mxu0
      %v1098 = vadd.f32 0.0, %v1097
      %v1099 = vpop.f32.mrb[0].mxu0
      %1100 = vmatprep.mubr.bf16.mxu0 0
      %1101 = vmatmul.mubr.bf16.gmra.mrb[0].mxu0 %v942
      %v1102 = vpop.f32.mrb[0].mxu0
      %v1103 = vadd.f32 0.0, %v1102
      %v1104 = vpop.f32.mrb[0].mxu0
      %v1105 = vpop.f32.mrb[0].mxu0
      %v1106 = vadd.f32 0.0, %v1105
      %v1107 = vpop.f32.mrb[0].mxu0
      %1108 = vdwg.mxu0
      %1109 = vst [vmem:[#allocation2] sm:$0xff] %v983
      %1110 = vst [vmem:[#allocation2 + $0x8] sm:$0xff] %v986
      %1111 = vst [vmem:[#allocation2 + $0x10] sm:$0xff] %v991
      %1112 = vst [vmem:[#allocation2 + $0x18] sm:$0xff] %v994
      %1113 = vst [vmem:[#allocation2 + $0x20] sm:$0xff] %v999
      %1114 = vst [vmem:[#allocation2 + $0x28] sm:$0xff] %v1002
      %1115 = vst [vmem:[#allocation2 + $0x30] sm:$0xff] %v1007
      %1116 = vst [vmem:[#allocation2 + $0x38] sm:$0xff] %v1010
      %1117 = vst [vmem:[#allocation2 + $0x40] sm:$0xff] %v1015
      %1118 = vst [vmem:[#allocation2 + $0x48] sm:$0xff] %v1018
      %1119 = vst [vmem:[#allocation2 + $0x50] sm:$0xff] %v1023
      %1120 = vst [vmem:[#allocation2 + $0x58] sm:$0xff] %v1026
      %1121 = vst [vmem:[#allocation2 + $0x60] sm:$0xff] %v1031
      %1122 = vst [vmem:[#allocation2 + $0x68] sm:$0xff] %v1034
      %1123 = vst [vmem:[#allocation2 + $0x70] sm:$0xff] %v1039
      %1124 = vst [vmem:[#allocation2 + $0x78] sm:$0xff] %v1042
      %1125 = vst [vmem:[#allocation2 + $0x80] sm:$0xff] %v1047
      %1126 = vst [vmem:[#allocation2 + $0x88] sm:$0xff] %v1050
      %1127 = vst [vmem:[#allocation2 + $0x90] sm:$0xff] %v1055
      %1128 = vst [vmem:[#allocation2 + $0x98] sm:$0xff] %v1058
      %1129 = vst [vmem:[#allocation2 + $0xa0] sm:$0xff] %v1063
      %1130 = vst [vmem:[#allocation2 + $0xa8] sm:$0xff] %v1066
      %1131 = vst [vmem:[#allocation2 + $0xb0] sm:$0xff] %v1071
      %1132 = vst [vmem:[#allocation2 + $0xb8] sm:$0xff] %v1074
      %1133 = vst [vmem:[#allocation2 + $0xc0] sm:$0xff] %v1079
      %1134 = vst [vmem:[#allocation2 + $0xc8] sm:$0xff] %v1082
      %1135 = vst [vmem:[#allocation2 + $0xd0] sm:$0xff] %v1087
      %1136 = vst [vmem:[#allocation2 + $0xd8] sm:$0xff] %v1090
      %1137 = vst [vmem:[#allocation2 + $0xe0] sm:$0xff] %v1095
      %1138 = vst [vmem:[#allocation2 + $0xe8] sm:$0xff] %v1098
      %1139 = vst [vmem:[#allocation2 + $0xf0] sm:$0xff] %v1103
      %1140 = vst [vmem:[#allocation2 + $0xf8] sm:$0xff] %v1106
      %s1141 = scalar_lea.vmem %s1, 8
      %v1142 = vld [vmem:[%s1141] sm:$0xf]
      %v1143 = vld [vmem:[%s1141 + $0x4] sm:$0x3]
      %v1146 = vunpack.c.l.b16 %v1142
      %v1147 = vunpack.c.l.b16 %v1143
      %v1148 = vpack.c.b16 %v1147, %v1146
      %v1149 = vsel %vm911, %v901, 0
      %v1152 = vsel %vm944, %v1148, 0
      %1154 = vmatprep.subr.bf16.mxu0 0
      %1155 = vmatpush1.bf16.msra.mxu0 %v1152
      %1156 = vmatprep.subr.bf16.mxu0 0
      %1157 = vmatpush1.bf16.msra.mxu0 0
      %1158 = vmatprep.subr.bf16.mxu0 0
      %1159 = vmatpush1.bf16.msra.mxu0 0
      %1160 = vmatprep.subr.bf16.mxu0 0
      %1161 = vmatpush1.bf16.msra.mxu0 0
      %1162 = vmatprep.subr.bf16.mxu0 0
      %1163 = vmatpush1.bf16.msra.mxu0 0
      %1164 = vmatprep.subr.bf16.mxu0 0
      %1165 = vmatpush1.bf16.msra.mxu0 0
      %1166 = vmatprep.subr.bf16.mxu0 0
      %1167 = vmatpush1.bf16.msra.mxu0 0
      %1168 = vmatprep.subr.bf16.mxu0 0
      %1169 = vmatpush1.bf16.msra.mxu0 0
      %1170 = vmatprep.subr.bf16.mxu0 0
      %1171 = vmatpush1.bf16.msra.mxu0 0
      %1172 = vmatprep.subr.bf16.mxu0 0
      %1173 = vmatpush1.bf16.msra.mxu0 0
      %1174 = vmatprep.subr.bf16.mxu0 0
      %1175 = vmatpush1.bf16.msra.mxu0 0
      %1176 = vmatprep.subr.bf16.mxu0 0
      %1177 = vmatpush1.bf16.msra.mxu0 0
      %1178 = vmatprep.subr.bf16.mxu0 0
      %1179 = vmatpush1.bf16.msra.mxu0 0
      %1180 = vmatprep.subr.bf16.mxu0 0
      %1181 = vmatpush1.bf16.msra.mxu0 0
      %1182 = vmatprep.subr.bf16.mxu0 0
      %1183 = vmatpush1.bf16.msra.mxu0 0
      %1184 = vmatprep.subr.bf16.mxu0 0
      %1185 = vmatpush1.bf16.msra.mxu0 0
      %1186 = vmatprep.mubr.bf16.mxu0 0
      %1187 = vmatmul.mubr.bf16.gmra.mrb[0].mxu0 %v914
      %v1188 = vpop.f32.mrb[0].mxu0
      %v1189 = vadd.f32 0.0, %v1188
      %v1190 = vpop.f32.mrb[0].mxu0
      %v1191 = vpop.f32.mrb[0].mxu0
      %v1192 = vadd.f32 0.0, %v1191
      %v1193 = vpop.f32.mrb[0].mxu0
      %1194 = vmatprep.mubr.bf16.mxu0 0
      %1195 = vmatmul.mubr.bf16.gmra.mrb[0].mxu0 %v916
      %v1196 = vpop.f32.mrb[0].mxu0
      %v1197 = vadd.f32 0.0, %v1196
      %v1198 = vpop.f32.mrb[0].mxu0
      %v1199 = vpop.f32.mrb[0].mxu0
      %v1200 = vadd.f32 0.0, %v1199
      %v1201 = vpop.f32.mrb[0].mxu0
      %1202 = vmatprep.mubr.bf16.mxu0 0
      %1203 = vmatmul.mubr.bf16.gmra.mrb[0].mxu0 %v918
      %v1204 = vpop.f32.mrb[0].mxu0
      %v1205 = vadd.f32 0.0, %v1204
      %v1206 = vpop.f32.mrb[0].mxu0
      %v1207 = vpop.f32.mrb[0].mxu0
      %v1208 = vadd.f32 0.0, %v1207
      %v1209 = vpop.f32.mrb[0].mxu0
      %1210 = vmatprep.mubr.bf16.mxu0 0
      %1211 = vmatmul.mubr.bf16.gmra.mrb[0].mxu0 %v920
      %v1212 = vpop.f32.mrb[0].mxu0
      %v1213 = vadd.f32 0.0, %v1212
      %v1214 = vpop.f32.mrb[0].mxu0
      %v1215 = vpop.f32.mrb[0].mxu0
      %v1216 = vadd.f32 0.0, %v1215
      %v1217 = vpop.f32.mrb[0].mxu0
      %1218 = vmatprep.mubr.bf16.mxu0 0
      %1219 = vmatmul.mubr.bf16.gmra.mrb[0].mxu0 %v922
      %v1220 = vpop.f32.mrb[0].mxu0
      %v1221 = vadd.f32 0.0, %v1220
      %v1222 = vpop.f32.mrb[0].mxu0
      %v1223 = vpop.f32.mrb[0].mxu0
      %v1224 = vadd.f32 0.0, %v1223
      %v1225 = vpop.f32.mrb[0].mxu0
      %1226 = vmatprep.mubr.bf16.mxu0 0
      %1227 = vmatmul.mubr.bf16.gmra.mrb[0].mxu0 %v924
      %v1228 = vpop.f32.mrb[0].mxu0
      %v1229 = vadd.f32 0.0, %v1228
      %v1230 = vpop.f32.mrb[0].mxu0
      %v1231 = vpop.f32.mrb[0].mxu0
      %v1232 = vadd.f32 0.0, %v1231
      %v1233 = vpop.f32.mrb[0].mxu0
      %1234 = vmatprep.mubr.bf16.mxu0 0
      %1235 = vmatmul.mubr.bf16.gmra.mrb[0].mxu0 %v926
      %v1236 = vpop.f32.mrb[0].mxu0
      %v1237 = vadd.f32 0.0, %v1236
      %v1238 = vpop.f32.mrb[0].mxu0
      %v1239 = vpop.f32.mrb[0].mxu0
      %v1240 = vadd.f32 0.0, %v1239
      %v1241 = vpop.f32.mrb[0].mxu0
      %1242 = vmatprep.mubr.bf16.mxu0 0
      %1243 = vmatmul.mubr.bf16.gmra.mrb[0].mxu0 %v928
      %v1244 = vpop.f32.mrb[0].mxu0
      %v1245 = vadd.f32 0.0, %v1244
      %v1246 = vpop.f32.mrb[0].mxu0
      %v1247 = vpop.f32.mrb[0].mxu0
      %v1248 = vadd.f32 0.0, %v1247
      %v1249 = vpop.f32.mrb[0].mxu0
      %1250 = vmatprep.mubr.bf16.mxu0 0
      %1251 = vmatmul.mubr.bf16.gmra.mrb[0].mxu0 %v930
      %v1252 = vpop.f32.mrb[0].mxu0
      %v1253 = vadd.f32 0.0, %v1252
      %v1254 = vpop.f32.mrb[0].mxu0
      %v1255 = vpop.f32.mrb[0].mxu0
      %v1256 = vadd.f32 0.0, %v1255
      %v1257 = vpop.f32.mrb[0].mxu0
      %1258 = vmatprep.mubr.bf16.mxu0 0
      %1259 = vmatmul.mubr.bf16.gmra.mrb[0].mxu0 %v932
      %v1260 = vpop.f32.mrb[0].mxu0
      %v1261 = vadd.f32 0.0, %v1260
      %v1262 = vpop.f32.mrb[0].mxu0
      %v1263 = vpop.f32.mrb[0].mxu0
      %v1264 = vadd.f32 0.0, %v1263
      %v1265 = vpop.f32.mrb[0].mxu0
      %1266 = vmatprep.mubr.bf16.mxu0 0
      %1267 = vmatmul.mubr.bf16.gmra.mrb[0].mxu0 %v934
      %v1268 = vpop.f32.mrb[0].mxu0
      %v1269 = vadd.f32 0.0, %v1268
      %v1270 = vpop.f32.mrb[0].mxu0
      %v1271 = vpop.f32.mrb[0].mxu0
      %v1272 = vadd.f32 0.0, %v1271
      %v1273 = vpop.f32.mrb[0].mxu0
      %1274 = vmatprep.mubr.bf16.mxu0 0
      %1275 = vmatmul.mubr.bf16.gmra.mrb[0].mxu0 %v936
      %v1276 = vpop.f32.mrb[0].mxu0
      %v1277 = vadd.f32 0.0, %v1276
      %v1278 = vpop.f32.mrb[0].mxu0
      %v1279 = vpop.f32.mrb[0].mxu0
      %v1280 = vadd.f32 0.0, %v1279
      %v1281 = vpop.f32.mrb[0].mxu0
      %1282 = vmatprep.mubr.bf16.mxu0 0
      %1283 = vmatmul.mubr.bf16.gmra.mrb[0].mxu0 %v938
      %v1284 = vpop.f32.mrb[0].mxu0
      %v1285 = vadd.f32 0.0, %v1284
      %v1286 = vpop.f32.mrb[0].mxu0
      %v1287 = vpop.f32.mrb[0].mxu0
      %v1288 = vadd.f32 0.0, %v1287
      %v1289 = vpop.f32.mrb[0].mxu0
      %1290 = vmatprep.mubr.bf16.mxu0 0
      %1291 = vmatmul.mubr.bf16.gmra.mrb[0].mxu0 %v940
      %v1292 = vpop.f32.mrb[0].mxu0
      %v1293 = vadd.f32 0.0, %v1292
      %v1294 = vpop.f32.mrb[0].mxu0
      %v1295 = vpop.f32.mrb[0].mxu0
      %v1296 = vadd.f32 0.0, %v1295
      %v1297 = vpop.f32.mrb[0].mxu0
      %1298 = vmatprep.mubr.bf16.mxu0 0
      %1299 = vmatmul.mubr.bf16.gmra.mrb[0].mxu0 %v942
      %v1300 = vpop.f32.mrb[0].mxu0
      %v1301 = vadd.f32 0.0, %v1300
      %v1302 = vpop.f32.mrb[0].mxu0
      %v1303 = vpop.f32.mrb[0].mxu0
      %v1304 = vadd.f32 0.0, %v1303
      %v1305 = vpop.f32.mrb[0].mxu0
      %1306 = vmatprep.mubr.bf16.mxu0 0
      %1307 = vmatmul.mubr.bf16.gmra.mrb[0].mxu0 %v1149
      %v1308 = vpop.f32.mrb[0].mxu0
      %v1309 = vadd.f32 0.0, %v1308
      %v1310 = vpop.f32.mrb[0].mxu0
      %v1311 = vpop.f32.mrb[0].mxu0
      %v1312 = vadd.f32 0.0, %v1311
      %v1313 = vpop.f32.mrb[0].mxu0
      %1314 = vdwg.mxu0
      %v1315 = vld [vmem:[#allocation2] sm:$0xff]
      %v1316 = vld [vmem:[#allocation2 + $0x8] sm:$0xff]
      %v1317 = vld [vmem:[#allocation2 + $0x10] sm:$0xff]
      %v1318 = vld [vmem:[#allocation2 + $0x18] sm:$0xff]
      %v1319 = vld [vmem:[#allocation2 + $0x20] sm:$0xff]
      %v1320 = vld [vmem:[#allocation2 + $0x28] sm:$0xff]
      %v1321 = vld [vmem:[#allocation2 + $0x30] sm:$0xff]
      %v1322 = vld [vmem:[#allocation2 + $0x38] sm:$0xff]
      %v1323 = vld [vmem:[#allocation2 + $0x40] sm:$0xff]
      %v1324 = vld [vmem:[#allocation2 + $0x48] sm:$0xff]
      %v1325 = vld [vmem:[#allocation2 + $0x50] sm:$0xff]
      %v1326 = vld [vmem:[#allocation2 + $0x58] sm:$0xff]
      %v1327 = vld [vmem:[#allocation2 + $0x60] sm:$0xff]
      %v1328 = vld [vmem:[#allocation2 + $0x68] sm:$0xff]
      %v1329 = vld [vmem:[#allocation2 + $0x70] sm:$0xff]
      %v1330 = vld [vmem:[#allocation2 + $0x78] sm:$0xff]
      %v1331 = vld [vmem:[#allocation2 + $0x80] sm:$0xff]
      %v1332 = vld [vmem:[#allocation2 + $0x88] sm:$0xff]
      %v1333 = vld [vmem:[#allocation2 + $0x90] sm:$0xff]
      %v1334 = vld [vmem:[#allocation2 + $0x98] sm:$0xff]
      %v1335 = vld [vmem:[#allocation2 + $0xa0] sm:$0xff]
      %v1336 = vld [vmem:[#allocation2 + $0xa8] sm:$0xff]
      %v1337 = vld [vmem:[#allocation2 + $0xb0] sm:$0xff]
      %v1338 = vld [vmem:[#allocation2 + $0xb8] sm:$0xff]
      %v1339 = vld [vmem:[#allocation2 + $0xc0] sm:$0xff]
      %v1340 = vld [vmem:[#allocation2 + $0xc8] sm:$0xff]
      %v1341 = vld [vmem:[#allocation2 + $0xd0] sm:$0xff]
      %v1342 = vld [vmem:[#allocation2 + $0xd8] sm:$0xff]
      %v1343 = vld [vmem:[#allocation2 + $0xe0] sm:$0xff]
      %v1344 = vld [vmem:[#allocation2 + $0xe8] sm:$0xff]
      %v1345 = vld [vmem:[#allocation2 + $0xf0] sm:$0xff]
      %v1346 = vld [vmem:[#allocation2 + $0xf8] sm:$0xff]
      %v1347 = vadd.f32 %v1315, %v1189
      %v1348 = vadd.f32 %v1316, %v1192
      %v1349 = vadd.f32 %v1317, %v1197
      %v1350 = vadd.f32 %v1318, %v1200
      %v1351 = vadd.f32 %v1319, %v1205
      %v1352 = vadd.f32 %v1320, %v1208
      %v1353 = vadd.f32 %v1321, %v1213
      %v1354 = vadd.f32 %v1322, %v1216
      %v1355 = vadd.f32 %v1323, %v1221
      %v1356 = vadd.f32 %v1324, %v1224
      %v1357 = vadd.f32 %v1325, %v1229
      %v1358 = vadd.f32 %v1326, %v1232
      %v1359 = vadd.f32 %v1327, %v1237
      %v1360 = vadd.f32 %v1328, %v1240
      %v1361 = vadd.f32 %v1329, %v1245
      %v1362 = vadd.f32 %v1330, %v1248
      %v1363 = vadd.f32 %v1331, %v1253
      %v1364 = vadd.f32 %v1332, %v1256
      %v1365 = vadd.f32 %v1333, %v1261
      %v1366 = vadd.f32 %v1334, %v1264
      %v1367 = vadd.f32 %v1335, %v1269
      %v1368 = vadd.f32 %v1336, %v1272
      %v1369 = vadd.f32 %v1337, %v1277
      %v1370 = vadd.f32 %v1338, %v1280
      %v1371 = vadd.f32 %v1339, %v1285
      %v1372 = vadd.f32 %v1340, %v1288
      %v1373 = vadd.f32 %v1341, %v1293
      %v1374 = vadd.f32 %v1342, %v1296
      %v1375 = vadd.f32 %v1343, %v1301
      %v1376 = vadd.f32 %v1344, %v1304
      %v1377 = vadd.f32 %v1345, %v1309
      %v1378 = vadd.f32 %v1346, %v1312
      %1379 = vst [vmem:[#allocation2] sm:$0xff] %v1347
      %1380 = vst [vmem:[#allocation2 + $0x8] sm:$0xff] %v1348
      %1381 = vst [vmem:[#allocation2 + $0x10] sm:$0xff] %v1349
      %1382 = vst [vmem:[#allocation2 + $0x18] sm:$0xff] %v1350
      %1383 = vst [vmem:[#allocation2 + $0x20] sm:$0xff] %v1351
      %1384 = vst [vmem:[#allocation2 + $0x28] sm:$0xff] %v1352
      %1385 = vst [vmem:[#allocation2 + $0x30] sm:$0xff] %v1353
      %1386 = vst [vmem:[#allocation2 + $0x38] sm:$0xff] %v1354
      %1387 = vst [vmem:[#allocation2 + $0x40] sm:$0xff] %v1355
      %1388 = vst [vmem:[#allocation2 + $0x48] sm:$0xff] %v1356
      %1389 = vst [vmem:[#allocation2 + $0x50] sm:$0xff] %v1357
      %1390 = vst [vmem:[#allocation2 + $0x58] sm:$0xff] %v1358
      %1391 = vst [vmem:[#allocation2 + $0x60] sm:$0xff] %v1359
      %1392 = vst [vmem:[#allocation2 + $0x68] sm:$0xff] %v1360
      %1393 = vst [vmem:[#allocation2 + $0x70] sm:$0xff] %v1361
      %1394 = vst [vmem:[#allocation2 + $0x78] sm:$0xff] %v1362
      %1395 = vst [vmem:[#allocation2 + $0x80] sm:$0xff] %v1363
      %1396 = vst [vmem:[#allocation2 + $0x88] sm:$0xff] %v1364
      %1397 = vst [vmem:[#allocation2 + $0x90] sm:$0xff] %v1365
      %1398 = vst [vmem:[#allocation2 + $0x98] sm:$0xff] %v1366
      %1399 = vst [vmem:[#allocation2 + $0xa0] sm:$0xff] %v1367
      %1400 = vst [vmem:[#allocation2 + $0xa8] sm:$0xff] %v1368
      %1401 = vst [vmem:[#allocation2 + $0xb0] sm:$0xff] %v1369
      %1402 = vst [vmem:[#allocation2 + $0xb8] sm:$0xff] %v1370
      %1403 = vst [vmem:[#allocation2 + $0xc0] sm:$0xff] %v1371
      %1404 = vst [vmem:[#allocation2 + $0xc8] sm:$0xff] %v1372
      %1405 = vst [vmem:[#allocation2 + $0xd0] sm:$0xff] %v1373
      %1406 = vst [vmem:[#allocation2 + $0xd8] sm:$0xff] %v1374
      %1407 = vst [vmem:[#allocation2 + $0xe0] sm:$0xff] %v1375
      %1408 = vst [vmem:[#allocation2 + $0xe8] sm:$0xff] %v1376
      %1409 = vst [vmem:[#allocation2 + $0xf0] sm:$0xff] %v1377
      %1410 = vst [vmem:[#allocation2 + $0xf8] sm:$0xff] %v1378
      %s1411 = scalar_lea.vmem %s1, 16
      %v1412 = vld [vmem:[%s1411] sm:$0xf]
      %v1413 = vld [vmem:[%s1411 + $0x4] sm:$0x3]
      %v1416 = vunpack.c.l.b16 %v1412
      %v1417 = vunpack.c.l.b16 %v1413
      %v1418 = vpack.c.b16 %v1417, %v1416
      %v1419 = vsel %vm911, %v903, 0
      %v1422 = vsel %vm944, %v1418, 0
      %1424 = vmatprep.subr.bf16.mxu0 0
      %1425 = vmatpush1.bf16.msra.mxu0 %v1422
      %1426 = vmatprep.subr.bf16.mxu0 0
      %1427 = vmatpush1.bf16.msra.mxu0 0
      %1428 = vmatprep.subr.bf16.mxu0 0
      %1429 = vmatpush1.bf16.msra.mxu0 0
      %1430 = vmatprep.subr.bf16.mxu0 0
      %1431 = vmatpush1.bf16.msra.mxu0 0
      %1432 = vmatprep.subr.bf16.mxu0 0
      %1433 = vmatpush1.bf16.msra.mxu0 0
      %1434 = vmatprep.subr.bf16.mxu0 0
      %1435 = vmatpush1.bf16.msra.mxu0 0
      %1436 = vmatprep.subr.bf16.mxu0 0
      %1437 = vmatpush1.bf16.msra.mxu0 0
      %1438 = vmatprep.subr.bf16.mxu0 0
      %1439 = vmatpush1.bf16.msra.mxu0 0
      %1440 = vmatprep.subr.bf16.mxu0 0
      %1441 = vmatpush1.bf16.msra.mxu0 0
      %1442 = vmatprep.subr.bf16.mxu0 0
      %1443 = vmatpush1.bf16.msra.mxu0 0
      %1444 = vmatprep.subr.bf16.mxu0 0
      %1445 = vmatpush1.bf16.msra.mxu0 0
      %1446 = vmatprep.subr.bf16.mxu0 0
      %1447 = vmatpush1.bf16.msra.mxu0 0
      %1448 = vmatprep.subr.bf16.mxu0 0
      %1449 = vmatpush1.bf16.msra.mxu0 0
      %1450 = vmatprep.subr.bf16.mxu0 0
      %1451 = vmatpush1.bf16.msra.mxu0 0
      %1452 = vmatprep.subr.bf16.mxu0 0
      %1453 = vmatpush1.bf16.msra.mxu0 0
      %1454 = vmatprep.subr.bf16.mxu0 0
      %1455 = vmatpush1.bf16.msra.mxu0 0
      %1456 = vmatprep.mubr.bf16.mxu0 0
      %1457 = vmatmul.mubr.bf16.gmra.mrb[0].mxu0 %v916
      %v1458 = vpop.f32.mrb[0].mxu0
      %v1459 = vadd.f32 0.0, %v1458
      %v1460 = vpop.f32.mrb[0].mxu0
      %v1461 = vpop.f32.mrb[0].mxu0
      %v1462 = vadd.f32 0.0, %v1461
      %v1463 = vpop.f32.mrb[0].mxu0
      %1464 = vmatprep.mubr.bf16.mxu0 0
      %1465 = vmatmul.mubr.bf16.gmra.mrb[0].mxu0 %v918
      %v1466 = vpop.f32.mrb[0].mxu0
      %v1467 = vadd.f32 0.0, %v1466
      %v1468 = vpop.f32.mrb[0].mxu0
      %v1469 = vpop.f32.mrb[0].mxu0
      %v1470 = vadd.f32 0.0, %v1469
      %v1471 = vpop.f32.mrb[0].mxu0
      %1472 = vmatprep.mubr.bf16.mxu0 0
      %1473 = vmatmul.mubr.bf16.gmra.mrb[0].mxu0 %v920
      %v1474 = vpop.f32.mrb[0].mxu0
      %v1475 = vadd.f32 0.0, %v1474
      %v1476 = vpop.f32.mrb[0].mxu0
      %v1477 = vpop.f32.mrb[0].mxu0
      %v1478 = vadd.f32 0.0, %v1477
      %v1479 = vpop.f32.mrb[0].mxu0
      %1480 = vmatprep.mubr.bf16.mxu0 0
      %1481 = vmatmul.mubr.bf16.gmra.mrb[0].mxu0 %v922
      %v1482 = vpop.f32.mrb[0].mxu0
      %v1483 = vadd.f32 0.0, %v1482
      %v1484 = vpop.f32.mrb[0].mxu0
      %v1485 = vpop.f32.mrb[0].mxu0
      %v1486 = vadd.f32 0.0, %v1485
      %v1487 = vpop.f32.mrb[0].mxu0
      %1488 = vmatprep.mubr.bf16.mxu0 0
      %1489 = vmatmul.mubr.bf16.gmra.mrb[0].mxu0 %v924
      %v1490 = vpop.f32.mrb[0].mxu0
      %v1491 = vadd.f32 0.0, %v1490
      %v1492 = vpop.f32.mrb[0].mxu0
      %v1493 = vpop.f32.mrb[0].mxu0
      %v1494 = vadd.f32 0.0, %v1493
      %v1495 = vpop.f32.mrb[0].mxu0
      %1496 = vmatprep.mubr.bf16.mxu0 0
      %1497 = vmatmul.mubr.bf16.gmra.mrb[0].mxu0 %v926
      %v1498 = vpop.f32.mrb[0].mxu0
      %v1499 = vadd.f32 0.0, %v1498
      %v1500 = vpop.f32.mrb[0].mxu0
      %v1501 = vpop.f32.mrb[0].mxu0
      %v1502 = vadd.f32 0.0, %v1501
      %v1503 = vpop.f32.mrb[0].mxu0
      %1504 = vmatprep.mubr.bf16.mxu0 0
      %1505 = vmatmul.mubr.bf16.gmra.mrb[0].mxu0 %v928
      %v1506 = vpop.f32.mrb[0].mxu0
      %v1507 = vadd.f32 0.0, %v1506
      %v1508 = vpop.f32.mrb[0].mxu0
      %v1509 = vpop.f32.mrb[0].mxu0
      %v1510 = vadd.f32 0.0, %v1509
      %v1511 = vpop.f32.mrb[0].mxu0
      %1512 = vmatprep.mubr.bf16.mxu0 0
      %1513 = vmatmul.mubr.bf16.gmra.mrb[0].mxu0 %v930
      %v1514 = vpop.f32.mrb[0].mxu0
      %v1515 = vadd.f32 0.0, %v1514
      %v1516 = vpop.f32.mrb[0].mxu0
      %v1517 = vpop.f32.mrb[0].mxu0
      %v1518 = vadd.f32 0.0, %v1517
      %v1519 = vpop.f32.mrb[0].mxu0
      %1520 = vmatprep.mubr.bf16.mxu0 0
      %1521 = vmatmul.mubr.bf16.gmra.mrb[0].mxu0 %v932
      %v1522 = vpop.f32.mrb[0].mxu0
      %v1523 = vadd.f32 0.0, %v1522
      %v1524 = vpop.f32.mrb[0].mxu0
      %v1525 = vpop.f32.mrb[0].mxu0
      %v1526 = vadd.f32 0.0, %v1525
      %v1527 = vpop.f32.mrb[0].mxu0
      %1528 = vmatprep.mubr.bf16.mxu0 0
      %1529 = vmatmul.mubr.bf16.gmra.mrb[0].mxu0 %v934
      %v1530 = vpop.f32.mrb[0].mxu0
      %v1531 = vadd.f32 0.0, %v1530
      %v1532 = vpop.f32.mrb[0].mxu0
      %v1533 = vpop.f32.mrb[0].mxu0
      %v1534 = vadd.f32 0.0, %v1533
      %v1535 = vpop.f32.mrb[0].mxu0
      %1536 = vmatprep.mubr.bf16.mxu0 0
      %1537 = vmatmul.mubr.bf16.gmra.mrb[0].mxu0 %v936
      %v1538 = vpop.f32.mrb[0].mxu0
      %v1539 = vadd.f32 0.0, %v1538
      %v1540 = vpop.f32.mrb[0].mxu0
      %v1541 = vpop.f32.mrb[0].mxu0
      %v1542 = vadd.f32 0.0, %v1541
      %v1543 = vpop.f32.mrb[0].mxu0
      %1544 = vmatprep.mubr.bf16.mxu0 0
      %1545 = vmatmul.mubr.bf16.gmra.mrb[0].mxu0 %v938
      %v1546 = vpop.f32.mrb[0].mxu0
      %v1547 = vadd.f32 0.0, %v1546
      %v1548 = vpop.f32.mrb[0].mxu0
      %v1549 = vpop.f32.mrb[0].mxu0
      %v1550 = vadd.f32 0.0, %v1549
      %v1551 = vpop.f32.mrb[0].mxu0
      %1552 = vmatprep.mubr.bf16.mxu0 0
      %1553 = vmatmul.mubr.bf16.gmra.mrb[0].mxu0 %v940
      %v1554 = vpop.f32.mrb[0].mxu0
      %v1555 = vadd.f32 0.0, %v1554
      %v1556 = vpop.f32.mrb[0].mxu0
      %v1557 = vpop.f32.mrb[0].mxu0
      %v1558 = vadd.f32 0.0, %v1557
      %v1559 = vpop.f32.mrb[0].mxu0
      %1560 = vmatprep.mubr.bf16.mxu0 0
      %1561 = vmatmul.mubr.bf16.gmra.mrb[0].mxu0 %v942
      %v1562 = vpop.f32.mrb[0].mxu0
      %v1563 = vadd.f32 0.0, %v1562
      %v1564 = vpop.f32.mrb[0].mxu0
      %v1565 = vpop.f32.mrb[0].mxu0
      %v1566 = vadd.f32 0.0, %v1565
      %v1567 = vpop.f32.mrb[0].mxu0
      %1568 = vmatprep.mubr.bf16.mxu0 0
      %1569 = vmatmul.mubr.bf16.gmra.mrb[0].mxu0 %v1149
      %v1570 = vpop.f32.mrb[0].mxu0
      %v1571 = vadd.f32 0.0, %v1570
      %v1572 = vpop.f32.mrb[0].mxu0
      %v1573 = vpop.f32.mrb[0].mxu0
      %v1574 = vadd.f32 0.0, %v1573
      %v1575 = vpop.f32.mrb[0].mxu0
      %1576 = vmatprep.mubr.bf16.mxu0 0
      %1577 = vmatmul.mubr.bf16.gmra.mrb[0].mxu0 %v1419
      %v1578 = vpop.f32.mrb[0].mxu0
      %v1579 = vadd.f32 0.0, %v1578
      %v1580 = vpop.f32.mrb[0].mxu0
      %v1581 = vpop.f32.mrb[0].mxu0
      %v1582 = vadd.f32 0.0, %v1581
      %v1583 = vpop.f32.mrb[0].mxu0
      %1584 = vdwg.mxu0
      %v1585 = vld [vmem:[#allocation2] sm:$0xff]
      %v1586 = vld [vmem:[#allocation2 + $0x8] sm:$0xff]
      %v1587 = vld [vmem:[#allocation2 + $0x10] sm:$0xff]
      %v1588 = vld [vmem:[#allocation2 + $0x18] sm:$0xff]
      %v1589 = vld [vmem:[#allocation2 + $0x20] sm:$0xff]
      %v1590 = vld [vmem:[#allocation2 + $0x28] sm:$0xff]
      %v1591 = vld [vmem:[#allocation2 + $0x30] sm:$0xff]
      %v1592 = vld [vmem:[#allocation2 + $0x38] sm:$0xff]
      %v1593 = vld [vmem:[#allocation2 + $0x40] sm:$0xff]
      %v1594 = vld [vmem:[#allocation2 + $0x48] sm:$0xff]
      %v1595 = vld [vmem:[#allocation2 + $0x50] sm:$0xff]
      %v1596 = vld [vmem:[#allocation2 + $0x58] sm:$0xff]
      %v1597 = vld [vmem:[#allocation2 + $0x60] sm:$0xff]
      %v1598 = vld [vmem:[#allocation2 + $0x68] sm:$0xff]
      %v1599 = vld [vmem:[#allocation2 + $0x70] sm:$0xff]
      %v1600 = vld [vmem:[#allocation2 + $0x78] sm:$0xff]
      %v1601 = vld [vmem:[#allocation2 + $0x80] sm:$0xff]
      %v1602 = vld [vmem:[#allocation2 + $0x88] sm:$0xff]
      %v1603 = vld [vmem:[#allocation2 + $0x90] sm:$0xff]
      %v1604 = vld [vmem:[#allocation2 + $0x98] sm:$0xff]
      %v1605 = vld [vmem:[#allocation2 + $0xa0] sm:$0xff]
      %v1606 = vld [vmem:[#allocation2 + $0xa8] sm:$0xff]
      %v1607 = vld [vmem:[#allocation2 + $0xb0] sm:$0xff]
      %v1608 = vld [vmem:[#allocation2 + $0xb8] sm:$0xff]
      %v1609 = vld [vmem:[#allocation2 + $0xc0] sm:$0xff]
      %v1610 = vld [vmem:[#allocation2 + $0xc8] sm:$0xff]
      %v1611 = vld [vmem:[#allocation2 + $0xd0] sm:$0xff]
      %v1612 = vld [vmem:[#allocation2 + $0xd8] sm:$0xff]
      %v1613 = vld [vmem:[#allocation2 + $0xe0] sm:$0xff]
      %v1614 = vld [vmem:[#allocation2 + $0xe8] sm:$0xff]
      %v1615 = vld [vmem:[#allocation2 + $0xf0] sm:$0xff]
      %v1616 = vld [vmem:[#allocation2 + $0xf8] sm:$0xff]
      %v1617 = vadd.f32 %v1585, %v1459
      %v1618 = vadd.f32 %v1586, %v1462
      %v1619 = vadd.f32 %v1587, %v1467
      %v1620 = vadd.f32 %v1588, %v1470
      %v1621 = vadd.f32 %v1589, %v1475
      %v1622 = vadd.f32 %v1590, %v1478
      %v1623 = vadd.f32 %v1591, %v1483
      %v1624 = vadd.f32 %v1592, %v1486
      %v1625 = vadd.f32 %v1593, %v1491
      %v1626 = vadd.f32 %v1594, %v1494
      %v1627 = vadd.f32 %v1595, %v1499
      %v1628 = vadd.f32 %v1596, %v1502
      %v1629 = vadd.f32 %v1597, %v1507
      %v1630 = vadd.f32 %v1598, %v1510
      %v1631 = vadd.f32 %v1599, %v1515
      %v1632 = vadd.f32 %v1600, %v1518
      %v1633 = vadd.f32 %v1601, %v1523
      %v1634 = vadd.f32 %v1602, %v1526
      %v1635 = vadd.f32 %v1603, %v1531
      %v1636 = vadd.f32 %v1604, %v1534
      %v1637 = vadd.f32 %v1605, %v1539
      %v1638 = vadd.f32 %v1606, %v1542
      %v1639 = vadd.f32 %v1607, %v1547
      %v1640 = vadd.f32 %v1608, %v1550
      %v1641 = vadd.f32 %v1609, %v1555
      %v1642 = vadd.f32 %v1610, %v1558
      %v1643 = vadd.f32 %v1611, %v1563
      %v1644 = vadd.f32 %v1612, %v1566
      %v1645 = vadd.f32 %v1613, %v1571
      %v1646 = vadd.f32 %v1614, %v1574
      %v1647 = vadd.f32 %v1615, %v1579
      %v1648 = vadd.f32 %v1616, %v1582
      %1649 = vst [vmem:[#allocation2] sm:$0xff] %v1617
      %1650 = vst [vmem:[#allocation2 + $0x8] sm:$0xff] %v1618
      %1651 = vst [vmem:[#allocation2 + $0x10] sm:$0xff] %v1619
      %1652 = vst [vmem:[#allocation2 + $0x18] sm:$0xff] %v1620
      %1653 = vst [vmem:[#allocation2 + $0x20] sm:$0xff] %v1621
      %1654 = vst [vmem:[#allocation2 + $0x28] sm:$0xff] %v1622
      %1655 = vst [vmem:[#allocation2 + $0x30] sm:$0xff] %v1623
      %1656 = vst [vmem:[#allocation2 + $0x38] sm:$0xff] %v1624
      %1657 = vst [vmem:[#allocation2 + $0x40] sm:$0xff] %v1625
      %1658 = vst [vmem:[#allocation2 + $0x48] sm:$0xff] %v1626
      %1659 = vst [vmem:[#allocation2 + $0x50] sm:$0xff] %v1627
      %1660 = vst [vmem:[#allocation2 + $0x58] sm:$0xff] %v1628
      %1661 = vst [vmem:[#allocation2 + $0x60] sm:$0xff] %v1629
      %1662 = vst [vmem:[#allocation2 + $0x68] sm:$0xff] %v1630
      %1663 = vst [vmem:[#allocation2 + $0x70] sm:$0xff] %v1631
      %1664 = vst [vmem:[#allocation2 + $0x78] sm:$0xff] %v1632
      %1665 = vst [vmem:[#allocation2 + $0x80] sm:$0xff] %v1633
      %1666 = vst [vmem:[#allocation2 + $0x88] sm:$0xff] %v1634
      %1667 = vst [vmem:[#allocation2 + $0x90] sm:$0xff] %v1635
      %1668 = vst [vmem:[#allocation2 + $0x98] sm:$0xff] %v1636
      %1669 = vst [vmem:[#allocation2 + $0xa0] sm:$0xff] %v1637
      %1670 = vst [vmem:[#allocation2 + $0xa8] sm:$0xff] %v1638
      %1671 = vst [vmem:[#allocation2 + $0xb0] sm:$0xff] %v1639
      %1672 = vst [vmem:[#allocation2 + $0xb8] sm:$0xff] %v1640
      %1673 = vst [vmem:[#allocation2 + $0xc0] sm:$0xff] %v1641
      %1674 = vst [vmem:[#allocation2 + $0xc8] sm:$0xff] %v1642
      %1675 = vst [vmem:[#allocation2 + $0xd0] sm:$0xff] %v1643
      %1676 = vst [vmem:[#allocation2 + $0xd8] sm:$0xff] %v1644
      %1677 = vst [vmem:[#allocation2 + $0xe0] sm:$0xff] %v1645
      %1678 = vst [vmem:[#allocation2 + $0xe8] sm:$0xff] %v1646
      %1679 = vst [vmem:[#allocation2 + $0xf0] sm:$0xff] %v1647
      %1680 = vst [vmem:[#allocation2 + $0xf8] sm:$0xff] %v1648
      %v1681 = vld [vmem:[#allocation2] sm:$0xff]
      %v1682 = vld [vmem:[#allocation2 + $0x8] sm:$0xff]
      %v1683 = vld [vmem:[#allocation2 + $0x10] sm:$0xff]
      %v1684 = vld [vmem:[#allocation2 + $0x18] sm:$0xff]
      %v1685 = vld [vmem:[#allocation2 + $0x20] sm:$0xff]
      %v1686 = vld [vmem:[#allocation2 + $0x28] sm:$0xff]
      %v1687 = vld [vmem:[#allocation2 + $0x30] sm:$0xff]
      %v1688 = vld [vmem:[#allocation2 + $0x38] sm:$0xff]
      %v1689 = vld [vmem:[#allocation2 + $0x40] sm:$0xff]
      %v1690 = vld [vmem:[#allocation2 + $0x48] sm:$0xff]
      %v1691 = vld [vmem:[#allocation2 + $0x50] sm:$0xff]
      %v1692 = vld [vmem:[#allocation2 + $0x58] sm:$0xff]
      %v1693 = vld [vmem:[#allocation2 + $0x60] sm:$0xff]
      %v1694 = vld [vmem:[#allocation2 + $0x68] sm:$0xff]
      %v1695 = vld [vmem:[#allocation2 + $0x70] sm:$0xff]
      %v1696 = vld [vmem:[#allocation2 + $0x78] sm:$0xff]
      %v1697 = vld [vmem:[#allocation2 + $0x80] sm:$0xff]
      %v1698 = vld [vmem:[#allocation2 + $0x88] sm:$0xff]
      %v1699 = vld [vmem:[#allocation2 + $0x90] sm:$0xff]
      %v1700 = vld [vmem:[#allocation2 + $0x98] sm:$0xff]
      %v1701 = vld [vmem:[#allocation2 + $0xa0] sm:$0xff]
      %v1702 = vld [vmem:[#allocation2 + $0xa8] sm:$0xff]
      %v1703 = vld [vmem:[#allocation2 + $0xb0] sm:$0xff]
      %v1704 = vld [vmem:[#allocation2 + $0xb8] sm:$0xff]
      %v1705 = vld [vmem:[#allocation2 + $0xc0] sm:$0xff]
      %v1706 = vld [vmem:[#allocation2 + $0xc8] sm:$0xff]
      %v1707 = vld [vmem:[#allocation2 + $0xd0] sm:$0xff]
      %v1708 = vld [vmem:[#allocation2 + $0xd8] sm:$0xff]
      %v1709 = vld [vmem:[#allocation2 + $0xe0] sm:$0xff]
      %v1710 = vld [vmem:[#allocation2 + $0xe8] sm:$0xff]
      %v1711 = vld [vmem:[#allocation2 + $0xf0] sm:$0xff]
      %v1712 = vld [vmem:[#allocation2 + $0xf8] sm:$0xff]
      %v1713 = vpack.c.bf16 %v1682, %v1681
      %v1714 = vpack.c.bf16 %v1684, %v1683
      %v1715 = vpack.c.bf16 %v1686, %v1685
      %v1716 = vpack.c.bf16 %v1688, %v1687
      %v1717 = vpack.c.bf16 %v1690, %v1689
      %v1718 = vpack.c.bf16 %v1692, %v1691
      %v1719 = vpack.c.bf16 %v1694, %v1693
      %v1720 = vpack.c.bf16 %v1696, %v1695
      %v1721 = vpack.c.bf16 %v1698, %v1697
      %v1722 = vpack.c.bf16 %v1700, %v1699
      %v1723 = vpack.c.bf16 %v1702, %v1701
      %v1724 = vpack.c.bf16 %v1704, %v1703
      %v1725 = vpack.c.bf16 %v1706, %v1705
      %v1726 = vpack.c.bf16 %v1708, %v1707
      %v1727 = vpack.c.bf16 %v1710, %v1709
      %v1728 = vpack.c.bf16 %v1712, %v1711
      %v1745 = vunpack.c.l.b16 %v1713
      %v1746 = vunpack.c.h.b16 %v1713
      %v1747 = vunpack.c.l.b16 %v1714
      %v1748 = vunpack.c.h.b16 %v1714
      %v1749 = vunpack.c.l.b16 %v1715
      %v1750 = vunpack.c.h.b16 %v1715
      %v1751 = vunpack.c.l.b16 %v1716
      %v1752 = vunpack.c.h.b16 %v1716
      %v1753 = vunpack.c.l.b16 %v1717
      %v1754 = vunpack.c.h.b16 %v1717
      %v1755 = vunpack.c.l.b16 %v1718
      %v1756 = vunpack.c.h.b16 %v1718
      %v1757 = vunpack.c.l.b16 %v1719
      %v1758 = vunpack.c.h.b16 %v1719
      %v1759 = vunpack.c.l.b16 %v1720
      %v1760 = vunpack.c.h.b16 %v1720
      %v1761 = vunpack.c.l.b16 %v1721
      %v1762 = vunpack.c.h.b16 %v1721
      %v1763 = vunpack.c.l.b16 %v1722
      %v1764 = vunpack.c.h.b16 %v1722
      %v1765 = vunpack.c.l.b16 %v1723
      %v1766 = vunpack.c.h.b16 %v1723
      %v1767 = vunpack.c.l.b16 %v1724
      %v1768 = vunpack.c.h.b16 %v1724
      %v1769 = vunpack.c.l.b16 %v1725
      %v1770 = vunpack.c.h.b16 %v1725
      %v1771 = vunpack.c.l.b16 %v1726
      %v1772 = vunpack.c.h.b16 %v1726
      %v1773 = vunpack.c.l.b16 %v1727
      %v1774 = vunpack.c.h.b16 %v1727
      %v1775 = vunpack.c.l.b16 %v1728
      %v1776 = vunpack.c.h.b16 %v1728
      %v1777 = vpack.c.b16 %v1745, %v1745
      %v1778 = vpack.c.b16 %v1746, %v1746
      %v1779 = vpack.c.b16 %v1747, %v1747
      %v1780 = vpack.c.b16 %v1748, %v1748
      %v1781 = vpack.c.b16 %v1749, %v1749
      %v1782 = vpack.c.b16 %v1750, %v1750
      %v1783 = vpack.c.b16 %v1751, %v1751
      %v1784 = vpack.c.b16 %v1752, %v1752
      %v1785 = vpack.c.b16 %v1753, %v1753
      %v1786 = vpack.c.b16 %v1754, %v1754
      %v1787 = vpack.c.b16 %v1755, %v1755
      %v1788 = vpack.c.b16 %v1756, %v1756
      %v1789 = vpack.c.b16 %v1757, %v1757
      %v1790 = vpack.c.b16 %v1758, %v1758
      %v1791 = vpack.c.b16 %v1759, %v1759
      %v1792 = vpack.c.b16 %v1760, %v1760
      %v1793 = vpack.c.b16 %v1761, %v1761
      %v1794 = vpack.c.b16 %v1762, %v1762
      %v1795 = vpack.c.b16 %v1763, %v1763
      %v1796 = vpack.c.b16 %v1764, %v1764
      %v1797 = vpack.c.b16 %v1765, %v1765
      %v1798 = vpack.c.b16 %v1766, %v1766
      %v1799 = vpack.c.b16 %v1767, %v1767
      %v1800 = vpack.c.b16 %v1768, %v1768
      %v1801 = vpack.c.b16 %v1769, %v1769
      %v1802 = vpack.c.b16 %v1770, %v1770
      %v1803 = vpack.c.b16 %v1771, %v1771
      %v1804 = vpack.c.b16 %v1772, %v1772
      %v1805 = vpack.c.b16 %v1773, %v1773
      %v1806 = vpack.c.b16 %v1774, %v1774
      %v1807 = vpack.c.b16 %v1775, %v1775
      %v1808 = vpack.c.b16 %v1776, %v1776
      %1841 = vst [vmem:[%s208] sm:$0xf] %v1777
      %1842 = vst [vmem:[%s208 + $0x4] sm:$0xf] %v1778
      %1843 = vst [vmem:[%s208 + $0x8] sm:$0xf] %v1779
      %1844 = vst [vmem:[%s208 + $0xc] sm:$0xf] %v1780
      %1845 = vst [vmem:[%s208 + $0x10] sm:$0xf] %v1781
      %1846 = vst [vmem:[%s208 + $0x14] sm:$0xf] %v1782
      %1847 = vst [vmem:[%s208 + $0x18] sm:$0xf] %v1783
      %1848 = vst [vmem:[%s208 + $0x1c] sm:$0xf] %v1784
      %1849 = vst [vmem:[%s208 + $0x20] sm:$0xf] %v1785
      %1850 = vst [vmem:[%s208 + $0x24] sm:$0xf] %v1786
      %1851 = vst [vmem:[%s208 + $0x28] sm:$0xf] %v1787
      %1852 = vst [vmem:[%s208 + $0x2c] sm:$0xf] %v1788
      %1853 = vst [vmem:[%s208 + $0x30] sm:$0xf] %v1789
      %1854 = vst [vmem:[%s208 + $0x34] sm:$0xf] %v1790
      %1855 = vst [vmem:[%s208 + $0x38] sm:$0xf] %v1791
      %1856 = vst [vmem:[%s208 + $0x3c] sm:$0xf] %v1792
      %1857 = vst [vmem:[%s208 + $0x40] sm:$0xf] %v1793
      %1858 = vst [vmem:[%s208 + $0x44] sm:$0xf] %v1794
      %1859 = vst [vmem:[%s208 + $0x48] sm:$0xf] %v1795
      %1860 = vst [vmem:[%s208 + $0x4c] sm:$0xf] %v1796
      %1861 = vst [vmem:[%s208 + $0x50] sm:$0xf] %v1797
      %1862 = vst [vmem:[%s208 + $0x54] sm:$0xf] %v1798
      %1863 = vst [vmem:[%s208 + $0x58] sm:$0xf] %v1799
      %1864 = vst [vmem:[%s208 + $0x5c] sm:$0xf] %v1800
      %1865 = vst [vmem:[%s208 + $0x60] sm:$0xf] %v1801
      %1866 = vst [vmem:[%s208 + $0x64] sm:$0xf] %v1802
      %1867 = vst [vmem:[%s208 + $0x68] sm:$0xf] %v1803
      %1868 = vst [vmem:[%s208 + $0x6c] sm:$0xf] %v1804
      %1869 = vst [vmem:[%s208 + $0x70] sm:$0xf] %v1805
      %1870 = vst [vmem:[%s208 + $0x74] sm:$0xf] %v1806
      %1871 = vst [vmem:[%s208 + $0x78] sm:$0xf] %v1807
      %1872 = vst [vmem:[%s208 + $0x7c] sm:$0xf] %v1808
      %v1873 = vadd.f32 %v1681, %v1682
      %v1874 = vadd.f32 %v1873, %v1683
      %v1875 = vadd.f32 %v1874, %v1684
      %v1876 = vadd.f32 %v1875, %v1685
      %v1877 = vadd.f32 %v1876, %v1686
      %v1878 = vadd.f32 %v1877, %v1687
      %v1879 = vadd.f32 %v1878, %v1688
      %v1880 = vadd.f32 %v1879, %v1689
      %v1881 = vadd.f32 %v1880, %v1690
      %v1882 = vadd.f32 %v1881, %v1691
      %v1883 = vadd.f32 %v1882, %v1692
      %v1884 = vadd.f32 %v1883, %v1693
      %v1885 = vadd.f32 %v1884, %v1694
      %v1886 = vadd.f32 %v1885, %v1695
      %v1887 = vadd.f32 %v1886, %v1696
      %v1888 = vadd.f32 %v1887, %v1697
      %v1889 = vadd.f32 %v1888, %v1698
      %v1890 = vadd.f32 %v1889, %v1699
      %v1891 = vadd.f32 %v1890, %v1700
      %v1892 = vadd.f32 %v1891, %v1701
      %v1893 = vadd.f32 %v1892, %v1702
      %v1894 = vadd.f32 %v1893, %v1703
      %v1895 = vadd.f32 %v1894, %v1704
      %v1896 = vadd.f32 %v1895, %v1705
      %v1897 = vadd.f32 %v1896, %v1706
      %v1898 = vadd.f32 %v1897, %v1707
      %v1899 = vadd.f32 %v1898, %v1708
      %v1900 = vadd.f32 %v1899, %v1709
      %v1901 = vadd.f32 %v1900, %v1710
      %v1902 = vadd.f32 %v1901, %v1711
      %v1903 = vadd.f32 %v1902, %v1712
      %v1904 = vrot.slane %v1903, 4
      %v1905 = vadd.f32 %v1903, %v1904
      %v1906 = vrot.slane %v1905, 2
      %v1907 = vadd.f32 %v1905, %v1906
      %v1908 = vrot.slane %v1907, 1
      %v1909 = vadd.f32 %v1907, %v1908
      %1910 = vst [vmem:[%s211] sm:$0x1] %v1909
      %v1911 = vmul.f32 %v1681, %v1681
      %v1912 = vmul.f32 %v1682, %v1682
      %v1913 = vmul.f32 %v1683, %v1683
      %v1914 = vmul.f32 %v1684, %v1684
      %v1915 = vmul.f32 %v1685, %v1685
      %v1916 = vmul.f32 %v1686, %v1686
      %v1917 = vmul.f32 %v1687, %v1687
      %v1918 = vmul.f32 %v1688, %v1688
      %v1919 = vmul.f32 %v1689, %v1689
      %v1920 = vmul.f32 %v1690, %v1690
      %v1921 = vmul.f32 %v1691, %v1691
      %v1922 = vmul.f32 %v1692, %v1692
      %v1923 = vmul.f32 %v1693, %v1693
      %v1924 = vmul.f32 %v1694, %v1694
      %v1925 = vmul.f32 %v1695, %v1695
      %v1926 = vmul.f32 %v1696, %v1696
      %v1927 = vmul.f32 %v1697, %v1697
      %v1928 = vmul.f32 %v1698, %v1698
      %v1929 = vmul.f32 %v1699, %v1699
      %v1930 = vmul.f32 %v1700, %v1700
      %v1931 = vmul.f32 %v1701, %v1701
      %v1932 = vmul.f32 %v1702, %v1702
      %v1933 = vmul.f32 %v1703, %v1703
      %v1934 = vmul.f32 %v1704, %v1704
      %v1935 = vmul.f32 %v1705, %v1705
      %v1936 = vmul.f32 %v1706, %v1706
      %v1937 = vmul.f32 %v1707, %v1707
      %v1938 = vmul.f32 %v1708, %v1708
      %v1939 = vmul.f32 %v1709, %v1709
      %v1940 = vmul.f32 %v1710, %v1710
      %v1941 = vmul.f32 %v1711, %v1711
      %v1942 = vmul.f32 %v1712, %v1712
      %v1943 = vadd.f32 %v1911, %v1912
      %v1944 = vadd.f32 %v1943, %v1913
      %v1945 = vadd.f32 %v1944, %v1914
      %v1946 = vadd.f32 %v1945, %v1915
      %v1947 = vadd.f32 %v1946, %v1916
      %v1948 = vadd.f32 %v1947, %v1917
      %v1949 = vadd.f32 %v1948, %v1918
      %v1950 = vadd.f32 %v1949, %v1919
      %v1951 = vadd.f32 %v1950, %v1920
      %v1952 = vadd.f32 %v1951, %v1921
      %v1953 = vadd.f32 %v1952, %v1922
      %v1954 = vadd.f32 %v1953, %v1923
      %v1955 = vadd.f32 %v1954, %v1924
      %v1956 = vadd.f32 %v1955, %v1925
      %v1957 = vadd.f32 %v1956, %v1926
      %v1958 = vadd.f32 %v1957, %v1927
      %v1959 = vadd.f32 %v1958, %v1928
      %v1960 = vadd.f32 %v1959, %v1929
      %v1961 = vadd.f32 %v1960, %v1930
      %v1962 = vadd.f32 %v1961, %v1931
      %v1963 = vadd.f32 %v1962, %v1932
      %v1964 = vadd.f32 %v1963, %v1933
      %v1965 = vadd.f32 %v1964, %v1934
      %v1966 = vadd.f32 %v1965, %v1935
      %v1967 = vadd.f32 %v1966, %v1936
      %v1968 = vadd.f32 %v1967, %v1937
      %v1969 = vadd.f32 %v1968, %v1938
      %v1970 = vadd.f32 %v1969, %v1939
      %v1971 = vadd.f32 %v1970, %v1940
      %v1972 = vadd.f32 %v1971, %v1941
      %v1973 = vadd.f32 %v1972, %v1942
      %v1974 = vrot.slane %v1973, 4
      %v1975 = vadd.f32 %v1973, %v1974
      %v1976 = vrot.slane %v1975, 2
      %v1977 = vadd.f32 %v1975, %v1976
      %v1978 = vrot.slane %v1977, 1
      %v1979 = vadd.f32 %v1977, %v1978
      %1980 = vst [vmem:[%s214] sm:$0x1] %v1979
      %p1981 = scmp.lt.s32.totalorder %s16, 1
      %s1982 = scalar_select %p1981, %s16, 1
      %s1983 = smul.addr %s1982, 32
      %s1984 = smul.addr %s1983, 4
      %s1985 = scalar_lea.vmem %s2, %s1984
      %p1986 = scmp.lt.s32.totalorder %s16, 1
      %s1987 = scalar_select %p1986, %s16, 1
      %s1988 = scalar_lea.vmem %s3, %s1987
      %p1989 = scmp.lt.s32.totalorder %s16, 1
      %s1990 = scalar_select %p1989, %s16, 1
      %s1991 = scalar_lea.vmem %s4, %s1990
      // Predicated region
      $region29: #{conv_bn_relu.2} parent=27 // pred_check
        %p1992 = pneg %p81
      $region30: #{conv_bn_relu.2} parent=27 // pred_check_branch
        %1994 = sbr.rel (%p1992) target = $region32
      $region31: #{conv_bn_relu.2} parent=27 // pred_region
        _
      $region32: #{conv_bn_relu.2} parent=27 // pred_fallthru
        _
      // Predicated region
      $region33: #{conv_bn_relu.2} parent=27 // pred_check
        %p1995 = pneg %p107
      $region34: #{conv_bn_relu.2} parent=27 // pred_check_branch
        %1997 = sbr.rel (%p1995) target = $region36
      $region35: #{conv_bn_relu.2} parent=27 // pred_region
        _
      $region36: #{conv_bn_relu.2} parent=27 // pred_fallthru
        _
      // Predicated region
      $region37: #{conv_bn_relu.2} parent=27 // pred_check
        %p1998 = pneg %p133
      $region38: #{conv_bn_relu.2} parent=27 // pred_check_branch
        %2000 = sbr.rel (%p1998) target = $region40
      $region39: #{conv_bn_relu.2} parent=27 // pred_region
        _
      $region40: #{conv_bn_relu.2} parent=27 // pred_fallthru
        _
    $region28: #{conv_bn_relu.2} parent=5 // pred_fallthru
      _
    %p2001 = scmp.le.s32.totalorder 2, %s11
    // Predicated region
    $region41: #{conv_bn_relu.2} parent=5 // pred_check
      %p2002 = pneg %p2001
    $region42: #{conv_bn_relu.2} parent=5 // pred_check_branch
      %2004 = sbr.rel (%p2002) target = $region44
    $region43: #{conv_bn_relu.2} parent=5 // pred_region
      %s2005 = ssub.s32 %s11, 2
      // Predicated region
      $region45: #{conv_bn_relu.2} parent=43 // pred_check
        %p2006 = pneg %p87
      $region46: #{conv_bn_relu.2} parent=43 // pred_check_branch
        %2008 = sbr.rel (%p2006) target = $region48
      $region47: #{conv_bn_relu.2} parent=43 // pred_region
        %p2009 = scmp.lt.s32.totalorder %s17, 1
        %s2010 = scalar_select %p2009, %s17, 1
        %s2011 = smul.addr %s2010, 32
        %s2012 = smul.addr %s2011, 4
        %s2013 = scalar_lea.vmem %s2, %s2012
      $region48: #{conv_bn_relu.2} parent=43 // pred_fallthru
        _
      // Predicated region
      $region49: #{conv_bn_relu.2} parent=43 // pred_check
        %p2014 = pneg %p113
      $region50: #{conv_bn_relu.2} parent=43 // pred_check_branch
        %2016 = sbr.rel (%p2014) target = $region52
      $region51: #{conv_bn_relu.2} parent=43 // pred_region
        %p2017 = scmp.lt.s32.totalorder %s17, 1
        %s2018 = scalar_select %p2017, %s17, 1
        %s2019 = scalar_lea.vmem %s3, %s2018
      $region52: #{conv_bn_relu.2} parent=43 // pred_fallthru
        _
      // Predicated region
      $region53: #{conv_bn_relu.2} parent=43 // pred_check
        %p2020 = pneg %p139
      $region54: #{conv_bn_relu.2} parent=43 // pred_check_branch
        %2022 = sbr.rel (%p2020) target = $region56
      $region55: #{conv_bn_relu.2} parent=43 // pred_region
        %p2023 = scmp.lt.s32.totalorder %s17, 1
        %s2024 = scalar_select %p2023, %s17, 1
        %s2025 = scalar_lea.vmem %s4, %s2024
      $region56: #{conv_bn_relu.2} parent=43 // pred_fallthru
        _
    $region44: #{conv_bn_relu.2} parent=5 // pred_fallthru
      _
  $region6: #{conv_bn_relu.2} parent=0 // loop_footer
    %s15 = sadd.s32 1, %s11
  $region7: #{conv_bn_relu.2} parent=0 // loop_footer_branch
    %10 = sbr.rel target = $region3
  $region8: #{conv_bn_relu.2} parent=0 // loop_exit
    _

</llo_original>
